<compile_context>
chip_gen: v6e
topology: v6e:2x2x1
jax: 0.10.0
libtpu: 0.0.40
codegen_flags: <defaults>
</compile_context>

<pallas_src>
from functools import lru_cache, partial

import numpy as np
import jax
import jax.numpy as jnp
from jax.experimental import pallas as pl
from jax.experimental.pallas import tpu as pltpu

NUM_CLASSES = 6
CONF_THRESHOLD = 0.5
BN_EPS = 1e-5


def _vmem():
    return pl.BlockSpec(memory_space=pltpu.MemorySpace.VMEM)


# ---------------------------- in-kernel helpers ----------------------------

def _shift_lanes(x, s):
    """y[:, r] = x[:, r + s]  (s is a static Python int).

    128-aligned lane widths: pltpu.roll on the otherwise-idle XLU (wrapped
    lanes are cancelled by the folded border masks / anchor-only selection).
    Tiny non-aligned widths: zero-filled concatenate fallback."""
    if s == 0:
        return x
    c, r = x.shape
    if r % 128 == 0:
        return pltpu.roll(x, shift=(-s) % r, axis=1)     # jnp.roll semantics
    z = jnp.zeros((c, abs(s)), dtype=x.dtype)
    if s > 0:
        return jnp.concatenate([x[:, s:], z], axis=1)
    return jnp.concatenate([z, x[:, :r + s]], axis=1)


def _pool_max(x, w):
    """Elementwise part of a 2x2 / stride-2 max pool (no compaction): the max of
    every pooling window lands on its top-left (anchor) row.  Compaction /
    averaging is done later by a single 0-1 (or 1/hw) matmul on the idle MXU."""
    return jnp.maximum(jnp.maximum(x, _shift_lanes(x, 1)),
                       jnp.maximum(_shift_lanes(x, w), _shift_lanes(x, w + 1)))


def _depthwise3x3(x, wt_ref, mk_ref, b_ref, w):
    """3x3 / stride-1 / pad-1 depthwise conv + (folded-BN) bias + ReLU.

    x: (C, R) f32; wt_ref: (C, 9) BN-folded per-channel tap weights;
    mk_ref: (9, R) border validity masks; b_ref: (C, 1); w: spatial row width."""
    acc = None
    for t in range(9):
        dy, dx = divmod(t, 3)
        s = (dy - 1) * w + (dx - 1)
        contrib = _shift_lanes(x, s) * mk_ref[t:t + 1, :] * wt_ref[:, t:t + 1]
        acc = contrib if acc is None else acc + contrib
    return jnp.maximum(acc + b_ref[...], 0.0)


# ---------------------------- fused network kernel ----------------------------

def _make_kernel(widths, mode):
    w1c, w1p, w2p = widths   # conv1-output width, pool1 width, pool2 width
    # mode: "forced" (always early exit), "early" (confidence gated), "plain" (no exit)

    def kernel(p_ref, w1_ref, b1_ref, sel1_ref,
               wdw2_ref, mk2_ref, b2a_ref, wpw2_ref, b2b_ref, sel2_ref, pavg2_ref,
               we1_ref, be1_ref, we2_ref, be2_ref,
               wdw3_ref, mk3_ref, b3a_ref, wpw3_ref, b3b_ref, pavg3_ref,
               wf_ref, bf_ref,
               out_ref, flag_ref, cmp_ref):
        # ---- block1: conv3x3/s2 (one im2col matmul) -> BN -> ReLU -> maxpool max ----
        a1 = jnp.dot(w1_ref[...], p_ref[...], preferred_element_type=jnp.float32)
        a1 = jnp.maximum(a1 + b1_ref[...], 0.0)
        m1 = _pool_max(a1, w1c)
        feat1 = jnp.dot(m1.astype(jnp.bfloat16), sel1_ref[...],
                        preferred_element_type=jnp.float32)            # (8, R1p)

        # ---- block2: dw3x3 -> BN -> ReLU -> pw1x1 -> BN -> ReLU -> maxpool max ----
        h2 = _depthwise3x3(feat1, wdw2_ref, mk2_ref, b2a_ref, w1p)
        z2 = jnp.dot(wpw2_ref[...], h2.astype(jnp.bfloat16),
                     preferred_element_type=jnp.float32)
        z2 = jnp.maximum(z2 + b2b_ref[...], 0.0)
        m2 = _pool_max(z2, w1p).astype(jnp.bfloat16)                   # (16, R1p)

        def early_logits():
            # maxpool compaction + global average pool fused into one matmul
            pooled2 = jnp.dot(m2, pavg2_ref[...],
                              preferred_element_type=jnp.float32)       # (16, N)
            e1 = jnp.dot(we1_ref[...], pooled2.astype(jnp.bfloat16),
                         preferred_element_type=jnp.float32)
            e1 = jnp.maximum(e1 + be1_ref[...], 0.0)
            return jnp.dot(we2_ref[...], e1.astype(jnp.bfloat16),
                           preferred_element_type=jnp.float32) + be2_ref[...]

        def final_logits():
            # ---- block3 + main head (only traced/executed when needed) ----
            feat2 = jnp.dot(m2, sel2_ref[...],
                            preferred_element_type=jnp.float32)         # (16, R2p)
            h3 = _depthwise3x3(feat2, wdw3_ref, mk3_ref, b3a_ref, w2p)
            z3 = jnp.dot(wpw3_ref[...], h3.astype(jnp.bfloat16),
                         preferred_element_type=jnp.float32)
            z3 = jnp.maximum(z3 + b3b_ref[...], 0.0)
            m3 = _pool_max(z3, w2p).astype(jnp.bfloat16)
            pooled3 = jnp.dot(m3, pavg3_ref[...],
                              preferred_element_type=jnp.float32)        # (32, N)
            return jnp.dot(wf_ref[...], pooled3.astype(jnp.bfloat16),
                           preferred_element_type=jnp.float32) + bf_ref[...]

        if mode == "forced":
            out_ref[...] = early_logits()
            flag_ref[0] = jnp.int32(1)
        elif mode == "plain":
            out_ref[...] = final_logits()
            flag_ref[0] = jnp.int32(0)
        else:  # "early": confidence-gated exit; block3 is skipped when it fires
            el = early_logits()                                          # (6, N)
            mx = jnp.max(el, axis=0, keepdims=True)
            denom = jnp.sum(jnp.exp(el - mx), axis=0, keepdims=True)
            conf = 1.0 / denom            # max softmax prob (numerator exp(0)=1)
            ok = jnp.min(conf, axis=1, keepdims=True) >= CONF_THRESHOLD  # (1, 1)
            cmp_ref[...] = ok.astype(jnp.int32)
            exit_now = cmp_ref[0, 0]      # scalar handoff via tiny VMEM scratch
            flag_ref[0] = exit_now        # SMEM scalar output

            @pl.when(exit_now == 1)
            def _():
                out_ref[...] = el

            @pl.when(exit_now == 0)
            def _():
                out_ref[...] = final_logits()

    return kernel


# ---------------------------- host-side constants / weight prep ----------------------------

def _pool_select(n, h, w):
    """0/1 matrix (n*h*w, n*(h//2)*(w//2)) selecting each 2x2 window's top-left row."""
    ho, wo = h // 2, w // 2
    sel = np.zeros((n * h * w, n * ho * wo), np.float32)
    for b in range(n):
        for i in range(ho):
            for j in range(wo):
                sel[b * h * w + (2 * i) * w + 2 * j, b * ho * wo + i * wo + j] = 1.0
    return sel


def _avg_matrix(n, h, w):
    """(n*h*w, n) matrix performing a per-sample global average pool."""
    m = np.zeros((n * h * w, n), np.float32)
    for b in range(n):
        m[b * h * w:(b + 1) * h * w, b] = 1.0 / float(h * w)
    return m


def _tap_mask(n, h, w):
    """(9, n*h*w) validity mask for 3x3 / pad-1 depthwise taps."""
    r = np.arange(n * h * w)
    hh = (r // w) % h
    ww = r % w
    m = np.zeros((9, n * h * w), np.float32)
    for t in range(9):
        dy, dx = divmod(t, 3)
        m[t] = ((hh + dy - 1 >= 0) & (hh + dy - 1 < h) &
                (ww + dx - 1 >= 0) & (ww + dx - 1 < w)).astype(np.float32)
    return m


@lru_cache(maxsize=None)
def _tables(n, h, w):
    """Cached numpy constant tables for a given (batch, height, width)."""
    h1c, w1c = h // 2, w // 2
    h1p, w1p = h // 4, w // 4
    h2p, w2p = h // 8, w // 8
    h3p, w3p = h // 16, w // 16
    sel1 = _pool_select(n, h1c, w1c)                                  # (R1c, R1p)
    sel2 = _pool_select(n, h1p, w1p)                                  # (R1p, R2p)
    pavg2 = sel2 @ _avg_matrix(n, h2p, w2p)                           # (R1p, N)
    pavg3 = _pool_select(n, h2p, w2p) @ _avg_matrix(n, h3p, w3p)      # (R2p, N)
    mk2 = _tap_mask(n, h1p, w1p)                                      # (9, R1p)
    mk3 = _tap_mask(n, h2p, w2p)                                      # (9, R2p)
    return sel1, sel2, pavg2, pavg3, mk2, mk3


def _im2col_s2_t(x_nhwc):
    """3x3 / stride-2 / pad-1 im2col, transposed to (27, N*Ho*Wo)."""
    n, h, w, c = x_nhwc.shape
    ho, wo = h // 2, w // 2
    xp = jnp.pad(x_nhwc, ((0, 0), (1, 1), (1, 1), (0, 0)))
    cols = [xp[:, ky:ky + 2 * ho:2, kx:kx + 2 * wo:2, :]
            for ky in range(3) for kx in range(3)]
    patches = jnp.stack(cols, axis=3).reshape(n * ho * wo, 9 * c)
    return patches.T


def _bn_fold(p, name):
    s = p[f'{name}_gamma'] / jnp.sqrt(p[f'{name}_var'] + BN_EPS)
    b = p[f'{name}_beta'] - p[f'{name}_mean'] * s
    return s, b


def init_params(key):
    ks = jax.random.split(key, 8)

    def kaiming(k, shape, fan_out):
        return jax.random.normal(k, shape, jnp.float32) * jnp.sqrt(2.0 / fan_out)

    p = {}
    # conv weights (PyTorch layout: (out, in/groups, kh, kw))
    p['w_conv1'] = kaiming(ks[0], (8, 3, 3, 3), 8 * 9)
    p['w_dw2'] = kaiming(ks[1], (8, 1, 3, 3), 9)
    p['w_pw2'] = kaiming(ks[2], (16, 8, 1, 1), 16)
    p['w_dw3'] = kaiming(ks[3], (16, 1, 3, 3), 9)
    p['w_pw3'] = kaiming(ks[4], (32, 16, 1, 1), 32)
    # linear layers: normal(0, 0.01), zero bias (PyTorch layout: (out, in))
    p['w_fc_e1'] = 0.01 * jax.random.normal(ks[5], (32, 16), jnp.float32)
    p['b_fc_e1'] = jnp.zeros((32,), jnp.float32)
    p['w_fc_e2'] = 0.01 * jax.random.normal(ks[6], (NUM_CLASSES, 32), jnp.float32)
    p['b_fc_e2'] = jnp.zeros((NUM_CLASSES,), jnp.float32)
    p['w_fc'] = 0.01 * jax.random.normal(ks[7], (NUM_CLASSES, 32), jnp.float32)
    p['b_fc'] = jnp.zeros((NUM_CLASSES,), jnp.float32)
    # batch-norm params (eval mode running stats)
    for name, c in (('bn1', 8), ('bn2a', 8), ('bn2b', 16), ('bn3a', 16), ('bn3b', 32)):
        p[f'{name}_gamma'] = jnp.ones((c,), jnp.float32)
        p[f'{name}_beta'] = jnp.zeros((c,), jnp.float32)
        p[f'{name}_mean'] = jnp.zeros((c,), jnp.float32)
        p[f'{name}_var'] = jnp.ones((c,), jnp.float32)
    return p


@partial(jax.jit, static_argnames=("mode",))
def _forward_impl(params, x_nchw, mode):
    n, _, h, w = (int(d) for d in x_nchw.shape)
    assert h % 16 == 0 and w % 16 == 0, "spatial dims must be divisible by 16"
    x = jnp.transpose(x_nchw, (0, 2, 3, 1)).astype(jnp.float32)   # NCHW -> NHWC

    w1c = w // 2          # conv1 output row width
    w1p = w // 4          # block2 conv row width (after pool1)
    w2p = w // 8          # block3 conv row width (after pool2)

    patches = _im2col_s2_t(x).astype(jnp.bfloat16)                # (27, n*h1c*w1c)

    # ---- fold BN (eval running stats) into the conv / pointwise weights ----
    s1, c1 = _bn_fold(params, 'bn1')
    w1 = (jnp.transpose(params['w_conv1'], (0, 2, 3, 1)).reshape(8, 27)
          * s1[:, None]).astype(jnp.bfloat16)
    b1 = c1[:, None]

    s2a, c2a = _bn_fold(params, 'bn2a')
    s2b, c2b = _bn_fold(params, 'bn2b')
    wdw2 = params['w_dw2'][:, 0].reshape(8, 9) * s2a[:, None]     # (8, 9) f32
    b2a = c2a[:, None]
    wpw2 = (params['w_pw2'][:, :, 0, 0] * s2b[:, None]).astype(jnp.bfloat16)
    b2b = c2b[:, None]

    s3a, c3a = _bn_fold(params, 'bn3a')
    s3b, c3b = _bn_fold(params, 'bn3b')
    wdw3 = params['w_dw3'][:, 0].reshape(16, 9) * s3a[:, None]    # (16, 9) f32
    b3a = c3a[:, None]
    wpw3 = (params['w_pw3'][:, :, 0, 0] * s3b[:, None]).astype(jnp.bfloat16)
    b3b = c3b[:, None]

    we1 = params['w_fc_e1'].astype(jnp.bfloat16); be1 = params['b_fc_e1'][:, None]
    we2 = params['w_fc_e2'].astype(jnp.bfloat16); be2 = params['b_fc_e2'][:, None]
    wf = params['w_fc'].astype(jnp.bfloat16);     bf = params['b_fc'][:, None]

    sel1_np, sel2_np, pavg2_np, pavg3_np, mk2_np, mk3_np = _tables(n, h, w)
    sel1 = jnp.asarray(sel1_np, jnp.bfloat16)
    sel2 = jnp.asarray(sel2_np, jnp.bfloat16)
    pavg2 = jnp.asarray(pavg2_np, jnp.bfloat16)
    pavg3 = jnp.asarray(pavg3_np, jnp.bfloat16)
    mk2 = jnp.asarray(mk2_np, jnp.float32)
    mk3 = jnp.asarray(mk3_np, jnp.float32)

    kernel = _make_kernel((w1c, w1p, w2p), mode)
    out_t, flag = pl.pallas_call(
        kernel,
        out_shape=(jax.ShapeDtypeStruct((NUM_CLASSES, n), jnp.float32),
                   jax.ShapeDtypeStruct((1,), jnp.int32)),
        in_specs=[_vmem()] * 23,
        out_specs=(_vmem(),
                   pl.BlockSpec(memory_space=pltpu.MemorySpace.SMEM)),
        scratch_shapes=[pltpu.VMEM((1, 1), jnp.int32)],
        compiler_params=pltpu.CompilerParams(vmem_limit_bytes=32 * 1024 * 1024),
    )(patches, w1, b1, sel1,
      wdw2, mk2, b2a, wpw2, b2b, sel2, pavg2,
      we1, be1, we2, be2,
      wdw3, mk3, b3a, wpw3, b3b, pavg3,
      wf, bf)

    outputs = out_t.T                       # (n, NUM_CLASSES)
    early_used = flag[0] > 0
    return outputs, early_used


def forward(params, x_nchw, use_early_exit=True, forced_exit=False, training=False):
    # TODO(synk): training-mode dropout is not implemented (eval semantics only).
    if forced_exit:
        mode = "forced"
    elif use_early_exit and not training:
        mode = "early"
    else:
        mode = "plain"
    return _forward_impl(params, x_nchw, mode)


if __name__ == "__main__":
    key = jax.random.PRNGKey(0)
    pkey, xkey = jax.random.split(key)
    params = init_params(pkey)
    x = jax.random.normal(xkey, (2, 3, 32, 32), jnp.float32)   # NCHW, like the PyTorch module

    # Default path: confidence-gated early exit (block3 skipped in-kernel if it fires).
    outputs, early_used = forward(params, x, use_early_exit=True, forced_exit=False)
    jax.block_until_ready(outputs)
    jax.block_until_ready(early_used)
    assert outputs.shape == (2, NUM_CLASSES)
    assert bool(jnp.all(jnp.isfinite(outputs)))

    # Forced early-exit path (block3 never traced).
    outputs_f, early_used_f = forward(params, x, use_early_exit=True, forced_exit=True)
    jax.block_until_ready(outputs_f)
    assert outputs_f.shape == (2, NUM_CLASSES)
    assert bool(early_used_f)

    # Plain path (early exit disabled).
    outputs_p, early_used_p = forward(params, x, use_early_exit=False)
    jax.block_until_ready(outputs_p)
    assert outputs_p.shape == (2, NUM_CLASSES)
    assert not bool(early_used_p)
    assert bool(jnp.all(jnp.isfinite(outputs_p)))

    print("KERNEL_OK")
</pallas_src>

<mosaic_0001>
module attributes {stable_mosaic.version = 11 : i64} {
  func.func @kernel(%arg0: memref<27x512xbf16, #tpu.memory_space<vmem>>, %arg1: memref<8x27xbf16, #tpu.memory_space<vmem>>, %arg2: memref<8x1xf32, #tpu.memory_space<vmem>>, %arg3: memref<512x128xbf16, #tpu.memory_space<vmem>>, %arg4: memref<8x9xf32, #tpu.memory_space<vmem>>, %arg5: memref<9x128xf32, #tpu.memory_space<vmem>>, %arg6: memref<8x1xf32, #tpu.memory_space<vmem>>, %arg7: memref<16x8xbf16, #tpu.memory_space<vmem>>, %arg8: memref<16x1xf32, #tpu.memory_space<vmem>>, %arg9: memref<128x32xbf16, #tpu.memory_space<vmem>>, %arg10: memref<128x2xbf16, #tpu.memory_space<vmem>>, %arg11: memref<32x16xbf16, #tpu.memory_space<vmem>>, %arg12: memref<32x1xf32, #tpu.memory_space<vmem>>, %arg13: memref<6x32xbf16, #tpu.memory_space<vmem>>, %arg14: memref<6x1xf32, #tpu.memory_space<vmem>>, %arg15: memref<16x9xf32, #tpu.memory_space<vmem>>, %arg16: memref<9x32xf32, #tpu.memory_space<vmem>>, %arg17: memref<16x1xf32, #tpu.memory_space<vmem>>, %arg18: memref<32x16xbf16, #tpu.memory_space<vmem>>, %arg19: memref<32x1xf32, #tpu.memory_space<vmem>>, %arg20: memref<32x2xbf16, #tpu.memory_space<vmem>>, %arg21: memref<6x32xbf16, #tpu.memory_space<vmem>>, %arg22: memref<6x1xf32, #tpu.memory_space<vmem>>, %arg23: memref<6x2xf32, #tpu.memory_space<vmem>>, %arg24: memref<1xi32, #tpu.memory_space<smem>>, %arg25: memref<1x1xi32, #tpu.memory_space<vmem>>) attributes {dimension_semantics = [], scalar_prefetch = 0 : i64, scratch_operands = 1 : i64, tpu.core_type = #tpu.core_type<tc>} {
    %c0 = arith.constant 0 : index
    %c0_0 = arith.constant 0 : index
    %0 = vector.load %arg1[%c0, %c0_0] : memref<8x27xbf16, #tpu.memory_space<vmem>>, vector<8x27xbf16>
    %c0_1 = arith.constant 0 : index
    %c0_2 = arith.constant 0 : index
    %1 = vector.load %arg0[%c0_1, %c0_2] : memref<27x512xbf16, #tpu.memory_space<vmem>>, vector<27x512xbf16>
    %cst = arith.constant dense<0.000000e+00> : vector<8x512xf32>
    %2 = tpu.matmul %0, %1, %cst {dimension_numbers = #tpu.dot_dimension_numbers<[1], [0], [0], [1], [0, 0, 1, 1], [], []>} : vector<8x27xbf16>, vector<27x512xbf16>, vector<8x512xf32> -> vector<8x512xf32>
    %c0_3 = arith.constant 0 : index
    %c0_4 = arith.constant 0 : index
    %3 = vector.load %arg2[%c0_3, %c0_4] : memref<8x1xf32, #tpu.memory_space<vmem>>, vector<8x1xf32>
    %4 = vector.broadcast %3 : vector<8x1xf32> to vector<8x512xf32>
    %5 = arith.addf %2, %4 : vector<8x512xf32>
    %cst_5 = arith.constant 0.000000e+00 : f32
    %6 = vector.broadcast %cst_5 : f32 to vector<8x512xf32>
    %7 = arith.maximumf %5, %6 : vector<8x512xf32>
    %c511_i32 = arith.constant 511 : i32
    %8 = tpu.dynamic_rotate %7 by %c511_i32 dim 1 : vector<8x512xf32>, i32 -> vector<8x512xf32>
    %9 = arith.maximumf %7, %8 : vector<8x512xf32>
    %c496_i32 = arith.constant 496 : i32
    %10 = tpu.dynamic_rotate %7 by %c496_i32 dim 1 : vector<8x512xf32>, i32 -> vector<8x512xf32>
    %c495_i32 = arith.constant 495 : i32
    %11 = tpu.dynamic_rotate %7 by %c495_i32 dim 1 : vector<8x512xf32>, i32 -> vector<8x512xf32>
    %12 = arith.maximumf %10, %11 : vector<8x512xf32>
    %13 = arith.maximumf %9, %12 : vector<8x512xf32>
    %14 = arith.truncf %13 : vector<8x512xf32> to vector<8x512xbf16>
    %c0_6 = arith.constant 0 : index
    %c0_7 = arith.constant 0 : index
    %15 = vector.load %arg3[%c0_6, %c0_7] : memref<512x128xbf16, #tpu.memory_space<vmem>>, vector<512x128xbf16>
    %cst_8 = arith.constant dense<0.000000e+00> : vector<8x128xf32>
    %16 = tpu.matmul %14, %15, %cst_8 {dimension_numbers = #tpu.dot_dimension_numbers<[1], [0], [0], [1], [0, 0, 1, 1], [], []>} : vector<8x512xbf16>, vector<512x128xbf16>, vector<8x128xf32> -> vector<8x128xf32>
    %c9_i32 = arith.constant 9 : i32
    %17 = tpu.dynamic_rotate %16 by %c9_i32 dim 1 : vector<8x128xf32>, i32 -> vector<8x128xf32>
    %c0_9 = arith.constant 0 : index
    %c0_10 = arith.constant 0 : index
    %18 = vector.load %arg5[%c0_9, %c0_10] : memref<9x128xf32, #tpu.memory_space<vmem>>, vector<1x128xf32>
    %19 = vector.broadcast %18 : vector<1x128xf32> to vector<8x128xf32>
    %20 = arith.mulf %17, %19 : vector<8x128xf32>
    %c0_11 = arith.constant 0 : index
    %c0_12 = arith.constant 0 : index
    %21 = vector.load %arg4[%c0_11, %c0_12] : memref<8x9xf32, #tpu.memory_space<vmem>>, vector<8x1xf32>
    %22 = vector.broadcast %21 : vector<8x1xf32> to vector<8x128xf32>
    %23 = arith.mulf %20, %22 : vector<8x128xf32>
    %c8_i32 = arith.constant 8 : i32
    %24 = tpu.dynamic_rotate %16 by %c8_i32 dim 1 : vector<8x128xf32>, i32 -> vector<8x128xf32>
    %c1 = arith.constant 1 : index
    %c0_13 = arith.constant 0 : index
    %25 = vector.load %arg5[%c1, %c0_13] : memref<9x128xf32, #tpu.memory_space<vmem>>, vector<1x128xf32>
    %26 = vector.broadcast %25 : vector<1x128xf32> to vector<8x128xf32>
    %27 = arith.mulf %24, %26 : vector<8x128xf32>
    %c0_14 = arith.constant 0 : index
    %c1_15 = arith.constant 1 : index
    %28 = vector.load %arg4[%c0_14, %c1_15] : memref<8x9xf32, #tpu.memory_space<vmem>>, vector<8x1xf32>
    %29 = vector.broadcast %28 : vector<8x1xf32> to vector<8x128xf32>
    %30 = arith.mulf %27, %29 : vector<8x128xf32>
    %31 = arith.addf %23, %30 : vector<8x128xf32>
    %c7_i32 = arith.constant 7 : i32
    %32 = tpu.dynamic_rotate %16 by %c7_i32 dim 1 : vector<8x128xf32>, i32 -> vector<8x128xf32>
    %c2 = arith.constant 2 : index
    %c0_16 = arith.constant 0 : index
    %33 = vector.load %arg5[%c2, %c0_16] : memref<9x128xf32, #tpu.memory_space<vmem>>, vector<1x128xf32>
    %34 = vector.broadcast %33 : vector<1x128xf32> to vector<8x128xf32>
    %35 = arith.mulf %32, %34 : vector<8x128xf32>
    %c0_17 = arith.constant 0 : index
    %c2_18 = arith.constant 2 : index
    %36 = vector.load %arg4[%c0_17, %c2_18] : memref<8x9xf32, #tpu.memory_space<vmem>>, vector<8x1xf32>
    %37 = vector.broadcast %36 : vector<8x1xf32> to vector<8x128xf32>
    %38 = arith.mulf %35, %37 : vector<8x128xf32>
    %39 = arith.addf %31, %38 : vector<8x128xf32>
    %c1_i32 = arith.constant 1 : i32
    %40 = tpu.dynamic_rotate %16 by %c1_i32 dim 1 : vector<8x128xf32>, i32 -> vector<8x128xf32>
    %c3 = arith.constant 3 : index
    %c0_19 = arith.constant 0 : index
    %41 = vector.load %arg5[%c3, %c0_19] : memref<9x128xf32, #tpu.memory_space<vmem>>, vector<1x128xf32>
    %42 = vector.broadcast %41 : vector<1x128xf32> to vector<8x128xf32>
    %43 = arith.mulf %40, %42 : vector<8x128xf32>
    %c0_20 = arith.constant 0 : index
    %c3_21 = arith.constant 3 : index
    %44 = vector.load %arg4[%c0_20, %c3_21] : memref<8x9xf32, #tpu.memory_space<vmem>>, vector<8x1xf32>
    %45 = vector.broadcast %44 : vector<8x1xf32> to vector<8x128xf32>
    %46 = arith.mulf %43, %45 : vector<8x128xf32>
    %47 = arith.addf %39, %46 : vector<8x128xf32>
    %c4 = arith.constant 4 : index
    %c0_22 = arith.constant 0 : index
    %48 = vector.load %arg5[%c4, %c0_22] : memref<9x128xf32, #tpu.memory_space<vmem>>, vector<1x128xf32>
    %49 = vector.broadcast %48 : vector<1x128xf32> to vector<8x128xf32>
    %50 = arith.mulf %16, %49 : vector<8x128xf32>
    %c0_23 = arith.constant 0 : index
    %c4_24 = arith.constant 4 : index
    %51 = vector.load %arg4[%c0_23, %c4_24] : memref<8x9xf32, #tpu.memory_space<vmem>>, vector<8x1xf32>
    %52 = vector.broadcast %51 : vector<8x1xf32> to vector<8x128xf32>
    %53 = arith.mulf %50, %52 : vector<8x128xf32>
    %54 = arith.addf %47, %53 : vector<8x128xf32>
    %c127_i32 = arith.constant 127 : i32
    %55 = tpu.dynamic_rotate %16 by %c127_i32 dim 1 : vector<8x128xf32>, i32 -> vector<8x128xf32>
    %c5 = arith.constant 5 : index
    %c0_25 = arith.constant 0 : index
    %56 = vector.load %arg5[%c5, %c0_25] : memref<9x128xf32, #tpu.memory_space<vmem>>, vector<1x128xf32>
    %57 = vector.broadcast %56 : vector<1x128xf32> to vector<8x128xf32>
    %58 = arith.mulf %55, %57 : vector<8x128xf32>
    %c0_26 = arith.constant 0 : index
    %c5_27 = arith.constant 5 : index
    %59 = vector.load %arg4[%c0_26, %c5_27] : memref<8x9xf32, #tpu.memory_space<vmem>>, vector<8x1xf32>
    %60 = vector.broadcast %59 : vector<8x1xf32> to vector<8x128xf32>
    %61 = arith.mulf %58, %60 : vector<8x128xf32>
    %62 = arith.addf %54, %61 : vector<8x128xf32>
    %c121_i32 = arith.constant 121 : i32
    %63 = tpu.dynamic_rotate %16 by %c121_i32 dim 1 : vector<8x128xf32>, i32 -> vector<8x128xf32>
    %c6 = arith.constant 6 : index
    %c0_28 = arith.constant 0 : index
    %64 = vector.load %arg5[%c6, %c0_28] : memref<9x128xf32, #tpu.memory_space<vmem>>, vector<1x128xf32>
    %65 = vector.broadcast %64 : vector<1x128xf32> to vector<8x128xf32>
    %66 = arith.mulf %63, %65 : vector<8x128xf32>
    %c0_29 = arith.constant 0 : index
    %c6_30 = arith.constant 6 : index
    %67 = vector.load %arg4[%c0_29, %c6_30] : memref<8x9xf32, #tpu.memory_space<vmem>>, vector<8x1xf32>
    %68 = vector.broadcast %67 : vector<8x1xf32> to vector<8x128xf32>
    %69 = arith.mulf %66, %68 : vector<8x128xf32>
    %70 = arith.addf %62, %69 : vector<8x128xf32>
    %c120_i32 = arith.constant 120 : i32
    %71 = tpu.dynamic_rotate %16 by %c120_i32 dim 1 : vector<8x128xf32>, i32 -> vector<8x128xf32>
    %c7 = arith.constant 7 : index
    %c0_31 = arith.constant 0 : index
    %72 = vector.load %arg5[%c7, %c0_31] : memref<9x128xf32, #tpu.memory_space<vmem>>, vector<1x128xf32>
    %73 = vector.broadcast %72 : vector<1x128xf32> to vector<8x128xf32>
    %74 = arith.mulf %71, %73 : vector<8x128xf32>
    %c0_32 = arith.constant 0 : index
    %c7_33 = arith.constant 7 : index
    %75 = vector.load %arg4[%c0_32, %c7_33] : memref<8x9xf32, #tpu.memory_space<vmem>>, vector<8x1xf32>
    %76 = vector.broadcast %75 : vector<8x1xf32> to vector<8x128xf32>
    %77 = arith.mulf %74, %76 : vector<8x128xf32>
    %78 = arith.addf %70, %77 : vector<8x128xf32>
    %c119_i32 = arith.constant 119 : i32
    %79 = tpu.dynamic_rotate %16 by %c119_i32 dim 1 : vector<8x128xf32>, i32 -> vector<8x128xf32>
    %c8 = arith.constant 8 : index
    %c0_34 = arith.constant 0 : index
    %80 = vector.load %arg5[%c8, %c0_34] : memref<9x128xf32, #tpu.memory_space<vmem>>, vector<1x128xf32>
    %81 = vector.broadcast %80 : vector<1x128xf32> to vector<8x128xf32>
    %82 = arith.mulf %79, %81 : vector<8x128xf32>
    %c0_35 = arith.constant 0 : index
    %c8_36 = arith.constant 8 : index
    %83 = vector.load %arg4[%c0_35, %c8_36] : memref<8x9xf32, #tpu.memory_space<vmem>>, vector<8x1xf32>
    %84 = vector.broadcast %83 : vector<8x1xf32> to vector<8x128xf32>
    %85 = arith.mulf %82, %84 : vector<8x128xf32>
    %86 = arith.addf %78, %85 : vector<8x128xf32>
    %c0_37 = arith.constant 0 : index
    %c0_38 = arith.constant 0 : index
    %87 = vector.load %arg6[%c0_37, %c0_38] : memref<8x1xf32, #tpu.memory_space<vmem>>, vector<8x1xf32>
    %88 = vector.broadcast %87 : vector<8x1xf32> to vector<8x128xf32>
    %89 = arith.addf %86, %88 : vector<8x128xf32>
    %cst_39 = arith.constant 0.000000e+00 : f32
    %90 = vector.broadcast %cst_39 : f32 to vector<8x128xf32>
    %91 = arith.maximumf %89, %90 : vector<8x128xf32>
    %c0_40 = arith.constant 0 : index
    %c0_41 = arith.constant 0 : index
    %92 = vector.load %arg7[%c0_40, %c0_41] : memref<16x8xbf16, #tpu.memory_space<vmem>>, vector<16x8xbf16>
    %93 = arith.truncf %91 : vector<8x128xf32> to vector<8x128xbf16>
    %cst_42 = arith.constant dense<0.000000e+00> : vector<16x128xf32>
    %94 = tpu.matmul %92, %93, %cst_42 {dimension_numbers = #tpu.dot_dimension_numbers<[1], [0], [0], [1], [0, 0, 1, 1], [], []>} : vector<16x8xbf16>, vector<8x128xbf16>, vector<16x128xf32> -> vector<16x128xf32>
    %c0_43 = arith.constant 0 : index
    %c0_44 = arith.constant 0 : index
    %95 = vector.load %arg8[%c0_43, %c0_44] : memref<16x1xf32, #tpu.memory_space<vmem>>, vector<16x1xf32>
    %96 = vector.broadcast %95 : vector<16x1xf32> to vector<16x128xf32>
    %97 = arith.addf %94, %96 : vector<16x128xf32>
    %cst_45 = arith.constant 0.000000e+00 : f32
    %98 = vector.broadcast %cst_45 : f32 to vector<16x128xf32>
    %99 = arith.maximumf %97, %98 : vector<16x128xf32>
    %c127_i32_46 = arith.constant 127 : i32
    %100 = tpu.dynamic_rotate %99 by %c127_i32_46 dim 1 : vector<16x128xf32>, i32 -> vector<16x128xf32>
    %101 = arith.maximumf %99, %100 : vector<16x128xf32>
    %c120_i32_47 = arith.constant 120 : i32
    %102 = tpu.dynamic_rotate %99 by %c120_i32_47 dim 1 : vector<16x128xf32>, i32 -> vector<16x128xf32>
    %c119_i32_48 = arith.constant 119 : i32
    %103 = tpu.dynamic_rotate %99 by %c119_i32_48 dim 1 : vector<16x128xf32>, i32 -> vector<16x128xf32>
    %104 = arith.maximumf %102, %103 : vector<16x128xf32>
    %105 = arith.maximumf %101, %104 : vector<16x128xf32>
    %106 = arith.truncf %105 : vector<16x128xf32> to vector<16x128xbf16>
    %c0_49 = arith.constant 0 : index
    %c0_50 = arith.constant 0 : index
    %107 = vector.load %arg10[%c0_49, %c0_50] : memref<128x2xbf16, #tpu.memory_space<vmem>>, vector<128x2xbf16>
    %cst_51 = arith.constant dense<0.000000e+00> : vector<16x2xf32>
    %108 = tpu.matmul %106, %107, %cst_51 {dimension_numbers = #tpu.dot_dimension_numbers<[1], [0], [0], [1], [0, 0, 1, 1], [], []>} : vector<16x128xbf16>, vector<128x2xbf16>, vector<16x2xf32> -> vector<16x2xf32>
    %c0_52 = arith.constant 0 : index
    %c0_53 = arith.constant 0 : index
    %109 = vector.load %arg11[%c0_52, %c0_53] : memref<32x16xbf16, #tpu.memory_space<vmem>>, vector<32x16xbf16>
    %110 = arith.truncf %108 : vector<16x2xf32> to vector<16x2xbf16>
    %cst_54 = arith.constant dense<0.000000e+00> : vector<32x2xf32>
    %111 = tpu.matmul %109, %110, %cst_54 {dimension_numbers = #tpu.dot_dimension_numbers<[1], [0], [0], [1], [0, 0, 1, 1], [], []>} : vector<32x16xbf16>, vector<16x2xbf16>, vector<32x2xf32> -> vector<32x2xf32>
    %c0_55 = arith.constant 0 : index
    %c0_56 = arith.constant 0 : index
    %112 = vector.load %arg12[%c0_55, %c0_56] : memref<32x1xf32, #tpu.memory_space<vmem>>, vector<32x1xf32>
    %113 = vector.broadcast %112 : vector<32x1xf32> to vector<32x2xf32>
    %114 = arith.addf %111, %113 : vector<32x2xf32>
    %cst_57 = arith.constant 0.000000e+00 : f32
    %115 = vector.broadcast %cst_57 : f32 to vector<32x2xf32>
    %116 = arith.maximumf %114, %115 : vector<32x2xf32>
    %c0_58 = arith.constant 0 : index
    %c0_59 = arith.constant 0 : index
    %117 = vector.load %arg13[%c0_58, %c0_59] : memref<6x32xbf16, #tpu.memory_space<vmem>>, vector<6x32xbf16>
    %118 = arith.truncf %116 : vector<32x2xf32> to vector<32x2xbf16>
    %cst_60 = arith.constant dense<0.000000e+00> : vector<6x2xf32>
    %119 = tpu.matmul %117, %118, %cst_60 {dimension_numbers = #tpu.dot_dimension_numbers<[1], [0], [0], [1], [0, 0, 1, 1], [], []>} : vector<6x32xbf16>, vector<32x2xbf16>, vector<6x2xf32> -> vector<6x2xf32>
    %c0_61 = arith.constant 0 : index
    %c0_62 = arith.constant 0 : index
    %120 = vector.load %arg14[%c0_61, %c0_62] : memref<6x1xf32, #tpu.memory_space<vmem>>, vector<6x1xf32>
    %121 = vector.broadcast %120 : vector<6x1xf32> to vector<6x2xf32>
    %122 = arith.addf %119, %121 : vector<6x2xf32>
    %cst_63 = arith.constant dense<0xFF800000> : vector<2xf32>
    %123 = vector.multi_reduction <maximumf>, %122, %cst_63 [0] : vector<6x2xf32> to vector<2xf32>
    %124 = vector.shape_cast %123 : vector<2xf32> to vector<1x2xf32>
    %125 = vector.broadcast %124 : vector<1x2xf32> to vector<6x2xf32>
    %126 = arith.subf %122, %125 : vector<6x2xf32>
    %127 = math.exp %126 : vector<6x2xf32>
    %cst_64 = arith.constant dense<0.000000e+00> : vector<2xf32>
    %128 = vector.multi_reduction <add>, %127, %cst_64 [0] : vector<6x2xf32> to vector<2xf32>
    %129 = vector.shape_cast %128 : vector<2xf32> to vector<1x2xf32>
    %cst_65 = arith.constant 1.000000e+00 : f32
    %130 = vector.broadcast %cst_65 : f32 to vector<1x2xf32>
    %131 = arith.divf %130, %129 : vector<1x2xf32>
    %cst_66 = arith.constant dense<0x7F800000> : vector<1xf32>
    %132 = vector.multi_reduction <minimumf>, %131, %cst_66 [1] : vector<1x2xf32> to vector<1xf32>
    %133 = vector.shape_cast %132 : vector<1xf32> to vector<1x1xf32>
    %cst_67 = arith.constant 5.000000e-01 : f32
    %134 = vector.broadcast %cst_67 : f32 to vector<1x1xf32>
    %135 = arith.cmpf oge, %133, %134 : vector<1x1xf32>
    %136 = arith.extui %135 : vector<1x1xi1> to vector<1x1xi32>
    %c0_68 = arith.constant 0 : index
    %c0_69 = arith.constant 0 : index
    %137 = vector.load %arg25[%c0_68, %c0_69] : memref<1x1xi32, #tpu.memory_space<vmem>>, vector<1x1xi32>
    tpu.vector_store %arg25[%c0_68, %c0_69], %136 {strides = array<i32>} : memref<1x1xi32, #tpu.memory_space<vmem>>, vector<1x1xi32>,
    %c0_70 = arith.constant 0 : index
    %c0_71 = arith.constant 0 : index
    %138 = vector.load %arg25[%c0_70, %c0_71] : memref<1x1xi32, #tpu.memory_space<vmem>>, vector<1x1xi32>
    %139 = vector.extract %138[0, 0] : i32 from vector<1x1xi32>
    %c0_72 = arith.constant 0 : index
    %140 = memref.load %arg24[%c0_72] : memref<1xi32, #tpu.memory_space<smem>>
    memref.store %139, %arg24[%c0_72] : memref<1xi32, #tpu.memory_space<smem>>
    %c1_i32_73 = arith.constant 1 : i32
    %141 = arith.cmpi eq, %139, %c1_i32_73 : i32
    %142 = arith.extui %141 : i1 to i32
    %c0_i32 = arith.constant 0 : i32
    %143 = arith.cmpi ne, %142, %c0_i32 : i32
    scf.if %143 {
      %c0_76 = arith.constant 0 : index
      %c0_77 = arith.constant 0 : index
      %147 = vector.load %arg23[%c0_76, %c0_77] : memref<6x2xf32, #tpu.memory_space<vmem>>, vector<6x2xf32>
      tpu.vector_store %arg23[%c0_76, %c0_77], %122 {strides = array<i32>} : memref<6x2xf32, #tpu.memory_space<vmem>>, vector<6x2xf32>,
    } else {
    }
    %c0_i32_74 = arith.constant 0 : i32
    %144 = arith.cmpi eq, %139, %c0_i32_74 : i32
    %145 = arith.extui %144 : i1 to i32
    %c0_i32_75 = arith.constant 0 : i32
    %146 = arith.cmpi ne, %145, %c0_i32_75 : i32
    scf.if %146 {
      %c0_76 = arith.constant 0 : index
      %c0_77 = arith.constant 0 : index
      %147 = vector.load %arg9[%c0_76, %c0_77] : memref<128x32xbf16, #tpu.memory_space<vmem>>, vector<128x32xbf16>
      %cst_78 = arith.constant dense<0.000000e+00> : vector<16x32xf32>
      %148 = tpu.matmul %106, %147, %cst_78 {dimension_numbers = #tpu.dot_dimension_numbers<[1], [0], [0], [1], [0, 0, 1, 1], [], []>} : vector<16x128xbf16>, vector<128x32xbf16>, vector<16x32xf32> -> vector<16x32xf32>
      %cst_79 = arith.constant 0.000000e+00 : f32
      %149 = vector.broadcast %cst_79 : f32 to vector<16x5xf32>
      %150 = vector.extract_strided_slice %148 {offsets = [0, 0], sizes = [16, 27], strides = [1, 1]} : vector<16x32xf32> to vector<16x27xf32>
      %151 = tpu.concatenate %149, %150 in 1 : vector<16x5xf32>, vector<16x27xf32> -> vector<16x32xf32>
      %c0_80 = arith.constant 0 : index
      %c0_81 = arith.constant 0 : index
      %152 = vector.load %arg16[%c0_80, %c0_81] : memref<9x32xf32, #tpu.memory_space<vmem>>, vector<1x32xf32>
      %153 = vector.broadcast %152 : vector<1x32xf32> to vector<16x32xf32>
      %154 = arith.mulf %151, %153 : vector<16x32xf32>
      %c0_82 = arith.constant 0 : index
      %c0_83 = arith.constant 0 : index
      %155 = vector.load %arg15[%c0_82, %c0_83] : memref<16x9xf32, #tpu.memory_space<vmem>>, vector<16x1xf32>
      %156 = vector.broadcast %155 : vector<16x1xf32> to vector<16x32xf32>
      %157 = arith.mulf %154, %156 : vector<16x32xf32>
      %cst_84 = arith.constant 0.000000e+00 : f32
      %158 = vector.broadcast %cst_84 : f32 to vector<16x4xf32>
      %159 = vector.extract_strided_slice %148 {offsets = [0, 0], sizes = [16, 28], strides = [1, 1]} : vector<16x32xf32> to vector<16x28xf32>
      %160 = tpu.concatenate %158, %159 in 1 : vector<16x4xf32>, vector<16x28xf32> -> vector<16x32xf32>
      %c1_85 = arith.constant 1 : index
      %c0_86 = arith.constant 0 : index
      %161 = vector.load %arg16[%c1_85, %c0_86] : memref<9x32xf32, #tpu.memory_space<vmem>>, vector<1x32xf32>
      %162 = vector.broadcast %161 : vector<1x32xf32> to vector<16x32xf32>
      %163 = arith.mulf %160, %162 : vector<16x32xf32>
      %c0_87 = arith.constant 0 : index
      %c1_88 = arith.constant 1 : index
      %164 = vector.load %arg15[%c0_87, %c1_88] : memref<16x9xf32, #tpu.memory_space<vmem>>, vector<16x1xf32>
      %165 = vector.broadcast %164 : vector<16x1xf32> to vector<16x32xf32>
      %166 = arith.mulf %163, %165 : vector<16x32xf32>
      %167 = arith.addf %157, %166 : vector<16x32xf32>
      %cst_89 = arith.constant 0.000000e+00 : f32
      %168 = vector.broadcast %cst_89 : f32 to vector<16x3xf32>
      %169 = vector.extract_strided_slice %148 {offsets = [0, 0], sizes = [16, 29], strides = [1, 1]} : vector<16x32xf32> to vector<16x29xf32>
      %170 = tpu.concatenate %168, %169 in 1 : vector<16x3xf32>, vector<16x29xf32> -> vector<16x32xf32>
      %c2_90 = arith.constant 2 : index
      %c0_91 = arith.constant 0 : index
      %171 = vector.load %arg16[%c2_90, %c0_91] : memref<9x32xf32, #tpu.memory_space<vmem>>, vector<1x32xf32>
      %172 = vector.broadcast %171 : vector<1x32xf32> to vector<16x32xf32>
      %173 = arith.mulf %170, %172 : vector<16x32xf32>
      %c0_92 = arith.constant 0 : index
      %c2_93 = arith.constant 2 : index
      %174 = vector.load %arg15[%c0_92, %c2_93] : memref<16x9xf32, #tpu.memory_space<vmem>>, vector<16x1xf32>
      %175 = vector.broadcast %174 : vector<16x1xf32> to vector<16x32xf32>
      %176 = arith.mulf %173, %175 : vector<16x32xf32>
      %177 = arith.addf %167, %176 : vector<16x32xf32>
      %cst_94 = arith.constant 0.000000e+00 : f32
      %178 = vector.broadcast %cst_94 : f32 to vector<16x1xf32>
      %179 = vector.extract_strided_slice %148 {offsets = [0, 0], sizes = [16, 31], strides = [1, 1]} : vector<16x32xf32> to vector<16x31xf32>
      %180 = tpu.concatenate %178, %179 in 1 : vector<16x1xf32>, vector<16x31xf32> -> vector<16x32xf32>
      %c3_95 = arith.constant 3 : index
      %c0_96 = arith.constant 0 : index
      %181 = vector.load %arg16[%c3_95, %c0_96] : memref<9x32xf32, #tpu.memory_space<vmem>>, vector<1x32xf32>
      %182 = vector.broadcast %181 : vector<1x32xf32> to vector<16x32xf32>
      %183 = arith.mulf %180, %182 : vector<16x32xf32>
      %c0_97 = arith.constant 0 : index
      %c3_98 = arith.constant 3 : index
      %184 = vector.load %arg15[%c0_97, %c3_98] : memref<16x9xf32, #tpu.memory_space<vmem>>, vector<16x1xf32>
      %185 = vector.broadcast %184 : vector<16x1xf32> to vector<16x32xf32>
      %186 = arith.mulf %183, %185 : vector<16x32xf32>
      %187 = arith.addf %177, %186 : vector<16x32xf32>
      %c4_99 = arith.constant 4 : index
      %c0_100 = arith.constant 0 : index
      %188 = vector.load %arg16[%c4_99, %c0_100] : memref<9x32xf32, #tpu.memory_space<vmem>>, vector<1x32xf32>
      %189 = vector.broadcast %188 : vector<1x32xf32> to vector<16x32xf32>
      %190 = arith.mulf %148, %189 : vector<16x32xf32>
      %c0_101 = arith.constant 0 : index
      %c4_102 = arith.constant 4 : index
      %191 = vector.load %arg15[%c0_101, %c4_102] : memref<16x9xf32, #tpu.memory_space<vmem>>, vector<16x1xf32>
      %192 = vector.broadcast %191 : vector<16x1xf32> to vector<16x32xf32>
      %193 = arith.mulf %190, %192 : vector<16x32xf32>
      %194 = arith.addf %187, %193 : vector<16x32xf32>
      %cst_103 = arith.constant 0.000000e+00 : f32
      %195 = vector.broadcast %cst_103 : f32 to vector<16x1xf32>
      %196 = vector.extract_strided_slice %148 {offsets = [0, 1], sizes = [16, 31], strides = [1, 1]} : vector<16x32xf32> to vector<16x31xf32>
      %197 = tpu.concatenate %196, %195 in 1 : vector<16x31xf32>, vector<16x1xf32> -> vector<16x32xf32>
      %c5_104 = arith.constant 5 : index
      %c0_105 = arith.constant 0 : index
      %198 = vector.load %arg16[%c5_104, %c0_105] : memref<9x32xf32, #tpu.memory_space<vmem>>, vector<1x32xf32>
      %199 = vector.broadcast %198 : vector<1x32xf32> to vector<16x32xf32>
      %200 = arith.mulf %197, %199 : vector<16x32xf32>
      %c0_106 = arith.constant 0 : index
      %c5_107 = arith.constant 5 : index
      %201 = vector.load %arg15[%c0_106, %c5_107] : memref<16x9xf32, #tpu.memory_space<vmem>>, vector<16x1xf32>
      %202 = vector.broadcast %201 : vector<16x1xf32> to vector<16x32xf32>
      %203 = arith.mulf %200, %202 : vector<16x32xf32>
      %204 = arith.addf %194, %203 : vector<16x32xf32>
      %cst_108 = arith.constant 0.000000e+00 : f32
      %205 = vector.broadcast %cst_108 : f32 to vector<16x3xf32>
      %206 = vector.extract_strided_slice %148 {offsets = [0, 3], sizes = [16, 29], strides = [1, 1]} : vector<16x32xf32> to vector<16x29xf32>
      %207 = tpu.concatenate %206, %205 in 1 : vector<16x29xf32>, vector<16x3xf32> -> vector<16x32xf32>
      %c6_109 = arith.constant 6 : index
      %c0_110 = arith.constant 0 : index
      %208 = vector.load %arg16[%c6_109, %c0_110] : memref<9x32xf32, #tpu.memory_space<vmem>>, vector<1x32xf32>
      %209 = vector.broadcast %208 : vector<1x32xf32> to vector<16x32xf32>
      %210 = arith.mulf %207, %209 : vector<16x32xf32>
      %c0_111 = arith.constant 0 : index
      %c6_112 = arith.constant 6 : index
      %211 = vector.load %arg15[%c0_111, %c6_112] : memref<16x9xf32, #tpu.memory_space<vmem>>, vector<16x1xf32>
      %212 = vector.broadcast %211 : vector<16x1xf32> to vector<16x32xf32>
      %213 = arith.mulf %210, %212 : vector<16x32xf32>
      %214 = arith.addf %204, %213 : vector<16x32xf32>
      %cst_113 = arith.constant 0.000000e+00 : f32
      %215 = vector.broadcast %cst_113 : f32 to vector<16x4xf32>
      %216 = vector.extract_strided_slice %148 {offsets = [0, 4], sizes = [16, 28], strides = [1, 1]} : vector<16x32xf32> to vector<16x28xf32>
      %217 = tpu.concatenate %216, %215 in 1 : vector<16x28xf32>, vector<16x4xf32> -> vector<16x32xf32>
      %c7_114 = arith.constant 7 : index
      %c0_115 = arith.constant 0 : index
      %218 = vector.load %arg16[%c7_114, %c0_115] : memref<9x32xf32, #tpu.memory_space<vmem>>, vector<1x32xf32>
      %219 = vector.broadcast %218 : vector<1x32xf32> to vector<16x32xf32>
      %220 = arith.mulf %217, %219 : vector<16x32xf32>
      %c0_116 = arith.constant 0 : index
      %c7_117 = arith.constant 7 : index
      %221 = vector.load %arg15[%c0_116, %c7_117] : memref<16x9xf32, #tpu.memory_space<vmem>>, vector<16x1xf32>
      %222 = vector.broadcast %221 : vector<16x1xf32> to vector<16x32xf32>
      %223 = arith.mulf %220, %222 : vector<16x32xf32>
      %224 = arith.addf %214, %223 : vector<16x32xf32>
      %cst_118 = arith.constant 0.000000e+00 : f32
      %225 = vector.broadcast %cst_118 : f32 to vector<16x5xf32>
      %226 = vector.extract_strided_slice %148 {offsets = [0, 5], sizes = [16, 27], strides = [1, 1]} : vector<16x32xf32> to vector<16x27xf32>
      %227 = tpu.concatenate %226, %225 in 1 : vector<16x27xf32>, vector<16x5xf32> -> vector<16x32xf32>
      %c8_119 = arith.constant 8 : index
      %c0_120 = arith.constant 0 : index
      %228 = vector.load %arg16[%c8_119, %c0_120] : memref<9x32xf32, #tpu.memory_space<vmem>>, vector<1x32xf32>
      %229 = vector.broadcast %228 : vector<1x32xf32> to vector<16x32xf32>
      %230 = arith.mulf %227, %229 : vector<16x32xf32>
      %c0_121 = arith.constant 0 : index
      %c8_122 = arith.constant 8 : index
      %231 = vector.load %arg15[%c0_121, %c8_122] : memref<16x9xf32, #tpu.memory_space<vmem>>, vector<16x1xf32>
      %232 = vector.broadcast %231 : vector<16x1xf32> to vector<16x32xf32>
      %233 = arith.mulf %230, %232 : vector<16x32xf32>
      %234 = arith.addf %224, %233 : vector<16x32xf32>
      %c0_123 = arith.constant 0 : index
      %c0_124 = arith.constant 0 : index
      %235 = vector.load %arg17[%c0_123, %c0_124] : memref<16x1xf32, #tpu.memory_space<vmem>>, vector<16x1xf32>
      %236 = vector.broadcast %235 : vector<16x1xf32> to vector<16x32xf32>
      %237 = arith.addf %234, %236 : vector<16x32xf32>
      %cst_125 = arith.constant 0.000000e+00 : f32
      %238 = vector.broadcast %cst_125 : f32 to vector<16x32xf32>
      %239 = arith.maximumf %237, %238 : vector<16x32xf32>
      %c0_126 = arith.constant 0 : index
      %c0_127 = arith.constant 0 : index
      %240 = vector.load %arg18[%c0_126, %c0_127] : memref<32x16xbf16, #tpu.memory_space<vmem>>, vector<32x16xbf16>
      %241 = arith.truncf %239 : vector<16x32xf32> to vector<16x32xbf16>
      %cst_128 = arith.constant dense<0.000000e+00> : vector<32x32xf32>
      %242 = tpu.matmul %240, %241, %cst_128 {dimension_numbers = #tpu.dot_dimension_numbers<[1], [0], [0], [1], [0, 0, 1, 1], [], []>} : vector<32x16xbf16>, vector<16x32xbf16>, vector<32x32xf32> -> vector<32x32xf32>
      %c0_129 = arith.constant 0 : index
      %c0_130 = arith.constant 0 : index
      %243 = vector.load %arg19[%c0_129, %c0_130] : memref<32x1xf32, #tpu.memory_space<vmem>>, vector<32x1xf32>
      %244 = vector.broadcast %243 : vector<32x1xf32> to vector<32x32xf32>
      %245 = arith.addf %242, %244 : vector<32x32xf32>
      %cst_131 = arith.constant 0.000000e+00 : f32
      %246 = vector.broadcast %cst_131 : f32 to vector<32x32xf32>
      %247 = arith.maximumf %245, %246 : vector<32x32xf32>
      %cst_132 = arith.constant 0.000000e+00 : f32
      %248 = vector.broadcast %cst_132 : f32 to vector<32x1xf32>
      %249 = vector.extract_strided_slice %247 {offsets = [0, 1], sizes = [32, 31], strides = [1, 1]} : vector<32x32xf32> to vector<32x31xf32>
      %250 = tpu.concatenate %249, %248 in 1 : vector<32x31xf32>, vector<32x1xf32> -> vector<32x32xf32>
      %251 = arith.maximumf %247, %250 : vector<32x32xf32>
      %cst_133 = arith.constant 0.000000e+00 : f32
      %252 = vector.broadcast %cst_133 : f32 to vector<32x4xf32>
      %253 = vector.extract_strided_slice %247 {offsets = [0, 4], sizes = [32, 28], strides = [1, 1]} : vector<32x32xf32> to vector<32x28xf32>
      %254 = tpu.concatenate %253, %252 in 1 : vector<32x28xf32>, vector<32x4xf32> -> vector<32x32xf32>
      %cst_134 = arith.constant 0.000000e+00 : f32
      %255 = vector.broadcast %cst_134 : f32 to vector<32x5xf32>
      %256 = vector.extract_strided_slice %247 {offsets = [0, 5], sizes = [32, 27], strides = [1, 1]} : vector<32x32xf32> to vector<32x27xf32>
      %257 = tpu.concatenate %256, %255 in 1 : vector<32x27xf32>, vector<32x5xf32> -> vector<32x32xf32>
      %258 = arith.maximumf %254, %257 : vector<32x32xf32>
      %259 = arith.maximumf %251, %258 : vector<32x32xf32>
      %260 = arith.truncf %259 : vector<32x32xf32> to vector<32x32xbf16>
      %c0_135 = arith.constant 0 : index
      %c0_136 = arith.constant 0 : index
      %261 = vector.load %arg20[%c0_135, %c0_136] : memref<32x2xbf16, #tpu.memory_space<vmem>>, vector<32x2xbf16>
      %cst_137 = arith.constant dense<0.000000e+00> : vector<32x2xf32>
      %262 = tpu.matmul %260, %261, %cst_137 {dimension_numbers = #tpu.dot_dimension_numbers<[1], [0], [0], [1], [0, 0, 1, 1], [], []>} : vector<32x32xbf16>, vector<32x2xbf16>, vector<32x2xf32> -> vector<32x2xf32>
      %c0_138 = arith.constant 0 : index
      %c0_139 = arith.constant 0 : index
      %263 = vector.load %arg21[%c0_138, %c0_139] : memref<6x32xbf16, #tpu.memory_space<vmem>>, vector<6x32xbf16>
      %264 = arith.truncf %262 : vector<32x2xf32> to vector<32x2xbf16>
      %cst_140 = arith.constant dense<0.000000e+00> : vector<6x2xf32>
      %265 = tpu.matmul %263, %264, %cst_140 {dimension_numbers = #tpu.dot_dimension_numbers<[1], [0], [0], [1], [0, 0, 1, 1], [], []>} : vector<6x32xbf16>, vector<32x2xbf16>, vector<6x2xf32> -> vector<6x2xf32>
      %c0_141 = arith.constant 0 : index
      %c0_142 = arith.constant 0 : index
      %266 = vector.load %arg22[%c0_141, %c0_142] : memref<6x1xf32, #tpu.memory_space<vmem>>, vector<6x1xf32>
      %267 = vector.broadcast %266 : vector<6x1xf32> to vector<6x2xf32>
      %268 = arith.addf %265, %267 : vector<6x2xf32>
      %c0_143 = arith.constant 0 : index
      %c0_144 = arith.constant 0 : index
      %269 = vector.load %arg23[%c0_143, %c0_144] : memref<6x2xf32, #tpu.memory_space<vmem>>, vector<6x2xf32>
      tpu.vector_store %arg23[%c0_143, %c0_144], %268 {strides = array<i32>} : memref<6x2xf32, #tpu.memory_space<vmem>>, vector<6x2xf32>,
    } else {
    }
    return
  }
}

</mosaic_0001>

<llo_original>
// kernel: squeeze.7
$region0: #{squeeze.7}
  %s0 = inlined_call_operand.vmem [shape: f32[16,3,3], index: 0, kind: input, shape index: {}]
  %s1 = inlined_call_operand.vmem [shape: f32[16,9], index: 1, kind: output, shape index: {}]
  $region1: #{squeeze.7} parent=0
    #allocation0 [shape = 'u8[12288]{0}', space=vmem, size = 0x3000, scoped, tag = 'scoped mem for input reshape']
    %s3 = sshll.u32 1, 4
    %s4 = ssub.s32 %s3, 1
    %s5 = smul.addr 4, 2
    %s6 = scalar_lea.vmem %s0, %s5
    %v7 = vld [vmem:[%s6] sm:%s4]
    %s8 = scalar_lea.vmem [#allocation0], 16
    %9 = vst [vmem:[%s8] sm:%s4] %v7
    %s10 = scalar_lea.vmem %s0, 4
    %v11 = vld [vmem:[%s10] sm:%s4]
    %s12 = scalar_lea.vmem [#allocation0], 8
    %13 = vst [vmem:[%s12] sm:%s4] %v11
    %v14 = vld [vmem:[%s0] sm:%s4]
    %15 = vst [vmem:[#allocation0] sm:%s4] %v14
    %v16 = vld [vmem:[#allocation0] sm:$0x7]
    %vm17 = vcmask 130048
    %18 = vst.msk [vmem:[%s1] sm:$0x7] %vm17, %v16
    %s19 = scalar_lea.vmem [#allocation0], 8
    %v20 = vld [vmem:[%s19] sm:$0x7]
    %vm21 = vcmask 130048
    %s22 = scalar_lea.vmem %s1, 3
    %23 = vst.msk [vmem:[%s22] sm:$0x7] %vm21, %v20
    %s24 = scalar_lea.vmem [#allocation0], 16
    %v25 = vld [vmem:[%s24] sm:$0x7]
    %vm26 = vcmask 130048
    %s27 = scalar_lea.vmem %s1, 6
    %28 = vst.msk [vmem:[%s27] sm:$0x7] %vm26, %v25

// kernel: squeeze.5
$region0: #{squeeze.5}
  %s0 = inlined_call_operand.vmem [shape: f32[8,3,3], index: 0, kind: input, shape index: {}]
  %s1 = inlined_call_operand.vmem [shape: f32[8,9], index: 1, kind: output, shape index: {}]
  $region1: #{squeeze.5} parent=0
    #allocation0 [shape = 'u8[12288]{0}', space=vmem, size = 0x3000, scoped, tag = 'scoped mem for input reshape']
    %s3 = sshll.u32 1, 4
    %s4 = ssub.s32 %s3, 1
    %s5 = smul.addr 4, 2
    %s6 = scalar_lea.vmem %s0, %s5
    %v7 = vld [vmem:[%s6] sm:%s4]
    %s8 = scalar_lea.vmem [#allocation0], 16
    %9 = vst [vmem:[%s8] sm:%s4] %v7
    %s10 = scalar_lea.vmem %s0, 4
    %v11 = vld [vmem:[%s10] sm:%s4]
    %s12 = scalar_lea.vmem [#allocation0], 8
    %13 = vst [vmem:[%s12] sm:%s4] %v11
    %v14 = vld [vmem:[%s0] sm:%s4]
    %15 = vst [vmem:[#allocation0] sm:%s4] %v14
    %v16 = vld [vmem:[#allocation0] sm:$0x7]
    %vm17 = vcmask 64512
    %18 = vst.msk [vmem:[%s1] sm:$0x7] %vm17, %v16
    %s19 = scalar_lea.vmem [#allocation0], 8
    %v20 = vld [vmem:[%s19] sm:$0x7]
    %vm21 = vcmask 64512
    %s22 = scalar_lea.vmem %s1, 3
    %23 = vst.msk [vmem:[%s22] sm:$0x7] %vm21, %v20
    %s24 = scalar_lea.vmem [#allocation0], 16
    %v25 = vld [vmem:[%s24] sm:$0x7]
    %vm26 = vcmask 64512
    %s27 = scalar_lea.vmem %s1, 6
    %28 = vst.msk [vmem:[%s27] sm:$0x7] %vm26, %v25

// kernel: _forward_impl.1
$region0: #{_forward_impl.1}
  #allocation0 [shape = 'u32[]', space=smem, size = 0x4, offset = 0x4, fixed_abs, tag = 'smem constant byte address 0x4 - core index']
  #allocation1 [shape = 'u32[144,128]{1,0:T(1,128)}', space=vmem, size = 0x12000, scoped, tag = 'internal scratch']
  #allocation2 [shape = 's32[1,1]{1,0:T(1,128)}', space=vmem, size = 0x200, scoped, tag = 'scratch operand']
  %s0 = inlined_call_operand.vmem [shape: bf16[27,512], index: 0, kind: input, shape index: {}]
  %s1 = inlined_call_operand.vmem [shape: bf16[8,27], index: 1, kind: input, shape index: {}]
  %s2 = inlined_call_operand.vmem [shape: f32[8,1], index: 2, kind: input, shape index: {}]
  %s3 = inlined_call_operand.vmem [shape: bf16[512,128], index: 3, kind: input, shape index: {}]
  %s4 = inlined_call_operand.vmem [shape: f32[8,9], index: 4, kind: input, shape index: {}]
  %s5 = inlined_call_operand.vmem [shape: f32[9,128], index: 5, kind: input, shape index: {}]
  %s6 = inlined_call_operand.vmem [shape: f32[8,1], index: 6, kind: input, shape index: {}]
  %s7 = inlined_call_operand.vmem [shape: bf16[16,8], index: 7, kind: input, shape index: {}]
  %s8 = inlined_call_operand.vmem [shape: f32[16,1], index: 8, kind: input, shape index: {}]
  %s9 = inlined_call_operand.vmem [shape: bf16[128,32], index: 9, kind: input, shape index: {}]
  %s10 = inlined_call_operand.vmem [shape: bf16[128,2], index: 10, kind: input, shape index: {}]
  %s11 = inlined_call_operand.vmem [shape: bf16[32,16], index: 11, kind: input, shape index: {}]
  %s12 = inlined_call_operand.vmem [shape: f32[32,1], index: 12, kind: input, shape index: {}]
  %s13 = inlined_call_operand.vmem [shape: bf16[6,32], index: 13, kind: input, shape index: {}]
  %s14 = inlined_call_operand.vmem [shape: f32[6,1], index: 14, kind: input, shape index: {}]
  %s15 = inlined_call_operand.vmem [shape: f32[16,9], index: 15, kind: input, shape index: {}]
  %s16 = inlined_call_operand.vmem [shape: f32[9,32], index: 16, kind: input, shape index: {}]
  %s17 = inlined_call_operand.vmem [shape: f32[16,1], index: 17, kind: input, shape index: {}]
  %s18 = inlined_call_operand.vmem [shape: bf16[32,16], index: 18, kind: input, shape index: {}]
  %s19 = inlined_call_operand.vmem [shape: f32[32,1], index: 19, kind: input, shape index: {}]
  %s20 = inlined_call_operand.vmem [shape: bf16[32,2], index: 20, kind: input, shape index: {}]
  %s21 = inlined_call_operand.vmem [shape: bf16[6,32], index: 21, kind: input, shape index: {}]
  %s22 = inlined_call_operand.vmem [shape: f32[6,1], index: 22, kind: input, shape index: {}]
  %s23 = inlined_call_operand.vmem [shape: f32[6,2], index: 23, kind: output, shape index: {0}]
  %s24 = inlined_call_operand.hbm [shape: s32[1], index: 24, kind: output, shape index: {1}]
  %25 = xla_tuple %s23, %s24
  %s26 = sld [smem:[#allocation0]]
  $region118: #{_forward_impl.1} parent=0
    _
  %s28 = ssub.s32 1, %s26
  %s29 = scalar_select 0, %s28, %s26
  $region1: #{_forward_impl.1} parent=0
    #allocation3 [shape = 'u8[512]{0}', space=smem, size = 0x200, scoped, tag = 'output window, operand 1, single buffered']
    #allocation4 [shape = 's32[1]{0}', space=sflag, size = 0x4, scoped, tag = 'scoped memory for _forward_impl.1']
    %30 = vsyncpa [#allocation4], 0
    // Predicated region
    $region2: #{_forward_impl.1} parent=1 // pred_check
      _
    $region3: #{_forward_impl.1} parent=1 // pred_check_branch
      %32 = sbr.rel (0) target = $region5
    $region4: #{_forward_impl.1} parent=1 // pred_region
      _
    $region5: #{_forward_impl.1} parent=1 // pred_fallthru
      _
    // Predicated region
    $region6: #{_forward_impl.1} parent=1 // pred_check
      _
    $region7: #{_forward_impl.1} parent=1 // pred_check_branch
      %34 = sbr.rel (0) target = $region9
    $region8: #{_forward_impl.1} parent=1 // pred_region
      _
    $region9: #{_forward_impl.1} parent=1 // pred_fallthru
      _
    // Predicated region
    $region10: #{_forward_impl.1} parent=1 // pred_check
      _
    $region11: #{_forward_impl.1} parent=1 // pred_check_branch
      %36 = sbr.rel (0) target = $region13
    $region12: #{_forward_impl.1} parent=1 // pred_region
      _
    $region13: #{_forward_impl.1} parent=1 // pred_fallthru
      _
    // Predicated region
    $region14: #{_forward_impl.1} parent=1 // pred_check
      _
    $region15: #{_forward_impl.1} parent=1 // pred_check_branch
      %38 = sbr.rel (0) target = $region17
    $region16: #{_forward_impl.1} parent=1 // pred_region
      _
    $region17: #{_forward_impl.1} parent=1 // pred_fallthru
      _
    // Predicated region
    $region18: #{_forward_impl.1} parent=1 // pred_check
      _
    $region19: #{_forward_impl.1} parent=1 // pred_check_branch
      %40 = sbr.rel (0) target = $region21
    $region20: #{_forward_impl.1} parent=1 // pred_region
      _
    $region21: #{_forward_impl.1} parent=1 // pred_fallthru
      _
    // Predicated region
    $region22: #{_forward_impl.1} parent=1 // pred_check
      _
    $region23: #{_forward_impl.1} parent=1 // pred_check_branch
      %42 = sbr.rel (0) target = $region25
    $region24: #{_forward_impl.1} parent=1 // pred_region
      _
    $region25: #{_forward_impl.1} parent=1 // pred_fallthru
      _
    // Predicated region
    $region26: #{_forward_impl.1} parent=1 // pred_check
      _
    $region27: #{_forward_impl.1} parent=1 // pred_check_branch
      %44 = sbr.rel (0) target = $region29
    $region28: #{_forward_impl.1} parent=1 // pred_region
      _
    $region29: #{_forward_impl.1} parent=1 // pred_fallthru
      _
    // Predicated region
    $region30: #{_forward_impl.1} parent=1 // pred_check
      _
    $region31: #{_forward_impl.1} parent=1 // pred_check_branch
      %46 = sbr.rel (0) target = $region33
    $region32: #{_forward_impl.1} parent=1 // pred_region
      _
    $region33: #{_forward_impl.1} parent=1 // pred_fallthru
      _
    // Predicated region
    $region34: #{_forward_impl.1} parent=1 // pred_check
      _
    $region35: #{_forward_impl.1} parent=1 // pred_check_branch
      %48 = sbr.rel (0) target = $region37
    $region36: #{_forward_impl.1} parent=1 // pred_region
      _
    $region37: #{_forward_impl.1} parent=1 // pred_fallthru
      _
    // Predicated region
    $region38: #{_forward_impl.1} parent=1 // pred_check
      _
    $region39: #{_forward_impl.1} parent=1 // pred_check_branch
      %50 = sbr.rel (0) target = $region41
    $region40: #{_forward_impl.1} parent=1 // pred_region
      _
    $region41: #{_forward_impl.1} parent=1 // pred_fallthru
      _
    // Predicated region
    $region42: #{_forward_impl.1} parent=1 // pred_check
      _
    $region43: #{_forward_impl.1} parent=1 // pred_check_branch
      %52 = sbr.rel (0) target = $region45
    $region44: #{_forward_impl.1} parent=1 // pred_region
      _
    $region45: #{_forward_impl.1} parent=1 // pred_fallthru
      _
    // Predicated region
    $region46: #{_forward_impl.1} parent=1 // pred_check
      _
    $region47: #{_forward_impl.1} parent=1 // pred_check_branch
      %54 = sbr.rel (0) target = $region49
    $region48: #{_forward_impl.1} parent=1 // pred_region
      _
    $region49: #{_forward_impl.1} parent=1 // pred_fallthru
      _
    // Predicated region
    $region50: #{_forward_impl.1} parent=1 // pred_check
      _
    $region51: #{_forward_impl.1} parent=1 // pred_check_branch
      %56 = sbr.rel (0) target = $region53
    $region52: #{_forward_impl.1} parent=1 // pred_region
      _
    $region53: #{_forward_impl.1} parent=1 // pred_fallthru
      _
    // Predicated region
    $region54: #{_forward_impl.1} parent=1 // pred_check
      _
    $region55: #{_forward_impl.1} parent=1 // pred_check_branch
      %58 = sbr.rel (0) target = $region57
    $region56: #{_forward_impl.1} parent=1 // pred_region
      _
    $region57: #{_forward_impl.1} parent=1 // pred_fallthru
      _
    // Predicated region
    $region58: #{_forward_impl.1} parent=1 // pred_check
      _
    $region59: #{_forward_impl.1} parent=1 // pred_check_branch
      %60 = sbr.rel (0) target = $region61
    $region60: #{_forward_impl.1} parent=1 // pred_region
      _
    $region61: #{_forward_impl.1} parent=1 // pred_fallthru
      _
    // Predicated region
    $region62: #{_forward_impl.1} parent=1 // pred_check
      _
    $region63: #{_forward_impl.1} parent=1 // pred_check_branch
      %62 = sbr.rel (0) target = $region65
    $region64: #{_forward_impl.1} parent=1 // pred_region
      _
    $region65: #{_forward_impl.1} parent=1 // pred_fallthru
      _
    // Predicated region
    $region66: #{_forward_impl.1} parent=1 // pred_check
      _
    $region67: #{_forward_impl.1} parent=1 // pred_check_branch
      %64 = sbr.rel (0) target = $region69
    $region68: #{_forward_impl.1} parent=1 // pred_region
      _
    $region69: #{_forward_impl.1} parent=1 // pred_fallthru
      _
    // Predicated region
    $region70: #{_forward_impl.1} parent=1 // pred_check
      _
    $region71: #{_forward_impl.1} parent=1 // pred_check_branch
      %66 = sbr.rel (0) target = $region73
    $region72: #{_forward_impl.1} parent=1 // pred_region
      _
    $region73: #{_forward_impl.1} parent=1 // pred_fallthru
      _
    // Predicated region
    $region74: #{_forward_impl.1} parent=1 // pred_check
      _
    $region75: #{_forward_impl.1} parent=1 // pred_check_branch
      %68 = sbr.rel (0) target = $region77
    $region76: #{_forward_impl.1} parent=1 // pred_region
      _
    $region77: #{_forward_impl.1} parent=1 // pred_fallthru
      _
    // Predicated region
    $region78: #{_forward_impl.1} parent=1 // pred_check
      _
    $region79: #{_forward_impl.1} parent=1 // pred_check_branch
      %70 = sbr.rel (0) target = $region81
    $region80: #{_forward_impl.1} parent=1 // pred_region
      _
    $region81: #{_forward_impl.1} parent=1 // pred_fallthru
      _
    // Predicated region
    $region82: #{_forward_impl.1} parent=1 // pred_check
      _
    $region83: #{_forward_impl.1} parent=1 // pred_check_branch
      %72 = sbr.rel (0) target = $region85
    $region84: #{_forward_impl.1} parent=1 // pred_region
      _
    $region85: #{_forward_impl.1} parent=1 // pred_fallthru
      _
    // Predicated region
    $region86: #{_forward_impl.1} parent=1 // pred_check
      _
    $region87: #{_forward_impl.1} parent=1 // pred_check_branch
      %74 = sbr.rel (0) target = $region89
    $region88: #{_forward_impl.1} parent=1 // pred_region
      _
    $region89: #{_forward_impl.1} parent=1 // pred_fallthru
      _
    // Predicated region
    $region90: #{_forward_impl.1} parent=1 // pred_check
      _
    $region91: #{_forward_impl.1} parent=1 // pred_check_branch
      %76 = sbr.rel (0) target = $region93
    $region92: #{_forward_impl.1} parent=1 // pred_region
      _
    $region93: #{_forward_impl.1} parent=1 // pred_fallthru
      _
    %v78 = vld [vmem:[%s1] sm:$0xf]
    %v79 = vld [vmem:[%s0] sm:$0xff]
    %v80 = vld [vmem:[%s0 + $0x8] sm:$0xff]
    %v81 = vld [vmem:[%s0 + $0x10] sm:$0xff]
    %v82 = vld [vmem:[%s0 + $0x18] sm:$0xff]
    %v83 = vld [vmem:[%s0 + $0x20] sm:$0xff]
    %v84 = vld [vmem:[%s0 + $0x28] sm:$0xff]
    %v85 = vld [vmem:[%s0 + $0x30] sm:$0x33]
    %v86 = vld [vmem:[%s0 + $0x38] sm:$0x33]
    %v87 = vld [vmem:[%s2] sm:$0xff]
    %89 = vset.pattern.permute.xlu0 0
    %90 = vperm.xlu0 %89, %v87
    %v91 = vpop.permute.xlu0 %90
    %v101 = vunpack.c.l.b16 %v79
    %v102 = vunpack.c.h.b16 %v79
    %v103 = vunpack.c.l.b16 %v80
    %v104 = vunpack.c.h.b16 %v80
    %v105 = vunpack.c.l.b16 %v81
    %v106 = vunpack.c.h.b16 %v81
    %v107 = vunpack.c.l.b16 %v82
    %v108 = vunpack.c.h.b16 %v82
    %v109 = vunpack.c.l.b16 %v83
    %v110 = vunpack.c.h.b16 %v83
    %v111 = vunpack.c.l.b16 %v84
    %v112 = vunpack.c.h.b16 %v84
    %v113 = vunpack.c.l.b16 %v85
    %v114 = vunpack.c.h.b16 %v85
    %v115 = vunpack.c.l.b16 %v86
    %v116 = vunpack.c.h.b16 %v86
    %v117 = vpack.c.b16 %v105, %v101
    %v118 = vpack.c.b16 %v106, %v102
    %v119 = vpack.c.b16 %v107, %v103
    %v120 = vpack.c.b16 %v108, %v104
    %v121 = vpack.c.b16 %v113, %v109
    %v122 = vpack.c.b16 %v114, %v110
    %v123 = vpack.c.b16 %v115, %v111
    %v124 = vpack.c.b16 %v116, %v112
    %vm129 = vcmask 220160
    %v131 = vsel %vm129, %v78, 0
    %vm133 = vcmask 1044480
    %vm134 = vcmask 1045504
    %v135 = vsel %vm133, 4294967295, 65535
    %v136 = vsel %vm134, %v135, 0
    %v138 = vand.u32 %v121, %v136
    %v141 = vand.u32 %v122, %v136
    %v144 = vand.u32 %v123, %v136
    %v147 = vand.u32 %v124, %v136
    %149 = vmatprep.subr.bf16.mxu0 0
    %150 = vmatpush1.bf16.msra.mxu0 0
    %151 = vmatprep.subr.bf16.mxu0 0
    %152 = vmatpush1.bf16.msra.mxu0 0
    %153 = vmatprep.subr.bf16.mxu0 0
    %154 = vmatpush1.bf16.msra.mxu0 0
    %155 = vmatprep.subr.bf16.mxu0 0
    %156 = vmatpush1.bf16.msra.mxu0 0
    %157 = vmatprep.subr.bf16.mxu0 0
    %158 = vmatpush1.bf16.msra.mxu0 0
    %159 = vmatprep.subr.bf16.mxu0 0
    %160 = vmatpush1.bf16.msra.mxu0 0
    %161 = vmatprep.subr.bf16.mxu0 %v141
    %162 = vmatpush1.bf16.msra.mxu0 %v138
    %163 = vmatprep.subr.bf16.mxu0 %v118
    %164 = vmatpush1.bf16.msra.mxu0 %v117
    %165 = vmatprep.subr.bf16.mxu0 0
    %166 = vmatpush2.bf16.msra.mxu0 0
    %167 = vmatprep.subr.bf16.mxu0 0
    %168 = vmatpush2.bf16.msra.mxu0 0
    %169 = vmatprep.subr.bf16.mxu0 0
    %170 = vmatpush2.bf16.msra.mxu0 0
    %171 = vmatprep.subr.bf16.mxu0 0
    %172 = vmatpush2.bf16.msra.mxu0 0
    %173 = vmatprep.subr.bf16.mxu0 0
    %174 = vmatpush2.bf16.msra.mxu0 0
    %175 = vmatprep.subr.bf16.mxu0 0
    %176 = vmatpush2.bf16.msra.mxu0 0
    %177 = vmatprep.subr.bf16.mxu0 0
    %178 = vmatpush2.bf16.msra.mxu0 0
    %179 = vmatprep.subr.bf16.mxu0 0
    %180 = vmatpush2.bf16.msra.mxu0 0
    %181 = vmatprep.mubr.bf16.mxu0 0
    %182 = vmatmul.mubr.bf16.gmra.mxu0 %v131
    %v183 = vpop.f32.mrf.mxu0
    %v184 = vadd.f32 %v91, %v183
    %v185 = vpop.f32.mrf.mxu0
    %v186 = vadd.f32 %v91, %v185
    %v187 = vpop.f32.mrf.mxu0
    %v188 = vpop.f32.mrf.mxu0
    %189 = vdwg.mxu0
    %190 = vmatprep.subr.bf16.mxu0 0
    %191 = vmatpush1.bf16.msra.mxu0 0
    %192 = vmatprep.subr.bf16.mxu0 0
    %193 = vmatpush1.bf16.msra.mxu0 0
    %194 = vmatprep.subr.bf16.mxu0 0
    %195 = vmatpush1.bf16.msra.mxu0 0
    %196 = vmatprep.subr.bf16.mxu0 0
    %197 = vmatpush1.bf16.msra.mxu0 0
    %198 = vmatprep.subr.bf16.mxu0 0
    %199 = vmatpush1.bf16.msra.mxu0 0
    %200 = vmatprep.subr.bf16.mxu0 0
    %201 = vmatpush1.bf16.msra.mxu0 0
    %202 = vmatprep.subr.bf16.mxu0 %v147
    %203 = vmatpush1.bf16.msra.mxu0 %v144
    %204 = vmatprep.subr.bf16.mxu0 %v120
    %205 = vmatpush1.bf16.msra.mxu0 %v119
    %206 = vmatprep.subr.bf16.mxu0 0
    %207 = vmatpush2.bf16.msra.mxu0 0
    %208 = vmatprep.subr.bf16.mxu0 0
    %209 = vmatpush2.bf16.msra.mxu0 0
    %210 = vmatprep.subr.bf16.mxu0 0
    %211 = vmatpush2.bf16.msra.mxu0 0
    %212 = vmatprep.subr.bf16.mxu0 0
    %213 = vmatpush2.bf16.msra.mxu0 0
    %214 = vmatprep.subr.bf16.mxu0 0
    %215 = vmatpush2.bf16.msra.mxu0 0
    %216 = vmatprep.subr.bf16.mxu0 0
    %217 = vmatpush2.bf16.msra.mxu0 0
    %218 = vmatprep.subr.bf16.mxu0 0
    %219 = vmatpush2.bf16.msra.mxu0 0
    %220 = vmatprep.subr.bf16.mxu0 0
    %221 = vmatpush2.bf16.msra.mxu0 0
    %222 = vmatprep.mubr.bf16.mxu0 0
    %223 = vmatmul.mubr.bf16.gmra.mxu0 %v131
    %v224 = vpop.f32.mrf.mxu0
    %v225 = vadd.f32 %v91, %v224
    %v226 = vpop.f32.mrf.mxu0
    %v227 = vadd.f32 %v91, %v226
    %v228 = vpop.f32.mrf.mxu0
    %v229 = vpop.f32.mrf.mxu0
    %230 = vdwg.mxu0
    %v231 = vmax.f32 %v184, 0.0
    %v232 = vmax.f32 %v186, 0.0
    %v233 = vmax.f32 %v225, 0.0
    %v234 = vmax.f32 %v227, 0.0
    %235 = vrot.lane.b32.xlu0 %v231, 127
    %v236 = vpop.permute.xlu0 %235
    %237 = vrot.lane.b32.xlu0 %v232, 127
    %v238 = vpop.permute.xlu0 %237
    %239 = vrot.lane.b32.xlu0 %v233, 127
    %v240 = vpop.permute.xlu0 %239
    %241 = vrot.lane.b32.xlu0 %v234, 127
    %v242 = vpop.permute.xlu0 %241
    %v243 = vlaneseq
    %v244 = vand.u32 %v243, 127
    %vm245 = vcmp.lt.s32.totalorder %v244, 127
    %v246 = vsel %vm245, %v240, %v242
    %v247 = vsel %vm245, %v238, %v240
    %v248 = vsel %vm245, %v236, %v238
    %v249 = vsel %vm245, %v242, %v236
    %v250 = vmax.f32 %v231, %v248
    %v251 = vmax.f32 %v232, %v247
    %v252 = vmax.f32 %v233, %v246
    %v253 = vmax.f32 %v234, %v249
    %254 = vrot.lane.b32.xlu0 %v231, 112
    %v255 = vpop.permute.xlu0 %254
    %256 = vrot.lane.b32.xlu0 %v232, 112
    %v257 = vpop.permute.xlu0 %256
    %258 = vrot.lane.b32.xlu0 %v233, 112
    %v259 = vpop.permute.xlu0 %258
    %260 = vrot.lane.b32.xlu0 %v234, 112
    %v261 = vpop.permute.xlu0 %260
    %vm262 = vcmp.lt.s32.totalorder %v244, 112
    %v263 = vsel %vm262, %v259, %v261
    %v264 = vsel %vm262, %v257, %v259
    %v265 = vsel %vm262, %v255, %v257
    %v266 = vsel %vm262, %v261, %v255
    %267 = vrot.lane.b32.xlu0 %v231, 111
    %v268 = vpop.permute.xlu0 %267
    %269 = vrot.lane.b32.xlu0 %v232, 111
    %v270 = vpop.permute.xlu0 %269
    %271 = vrot.lane.b32.xlu0 %v233, 111
    %v272 = vpop.permute.xlu0 %271
    %273 = vrot.lane.b32.xlu0 %v234, 111
    %v274 = vpop.permute.xlu0 %273
    %vm275 = vcmp.lt.s32.totalorder %v244, 111
    %v276 = vsel %vm275, %v272, %v274
    %v277 = vsel %vm275, %v270, %v272
    %v278 = vsel %vm275, %v268, %v270
    %v279 = vsel %vm275, %v274, %v268
    %v280 = vmax.f32 %v265, %v278
    %v281 = vmax.f32 %v264, %v277
    %v282 = vmax.f32 %v263, %v276
    %v283 = vmax.f32 %v266, %v279
    %v284 = vmax.f32 %v250, %v280
    %v285 = vmax.f32 %v251, %v281
    %v286 = vmax.f32 %v252, %v282
    %v287 = vmax.f32 %v253, %v283
    %v288 = vpack.c.bf16 %v284, %v284
    %v289 = vpack.c.bf16 %v285, %v285
    %v290 = vpack.c.bf16 %v286, %v286
    %v291 = vpack.c.bf16 %v287, %v287
    %v292 = vld [vmem:[%s3] sm:$0xf]
    %v293 = vld [vmem:[%s3 + $0x4] sm:$0xf]
    %v294 = vld [vmem:[%s3 + $0x8] sm:$0xf]
    %v295 = vld [vmem:[%s3 + $0xc] sm:$0xf]
    %v296 = vld [vmem:[%s3 + $0x10] sm:$0xf]
    %v297 = vld [vmem:[%s3 + $0x14] sm:$0xf]
    %v298 = vld [vmem:[%s3 + $0x18] sm:$0xf]
    %v299 = vld [vmem:[%s3 + $0x1c] sm:$0xf]
    %v300 = vld [vmem:[%s3 + $0x20] sm:$0xf]
    %v301 = vld [vmem:[%s3 + $0x24] sm:$0xf]
    %v302 = vld [vmem:[%s3 + $0x28] sm:$0xf]
    %v303 = vld [vmem:[%s3 + $0x2c] sm:$0xf]
    %v304 = vld [vmem:[%s3 + $0x30] sm:$0xf]
    %v305 = vld [vmem:[%s3 + $0x34] sm:$0xf]
    %v306 = vld [vmem:[%s3 + $0x38] sm:$0xf]
    %v307 = vld [vmem:[%s3 + $0x3c] sm:$0xf]
    %v308 = vld [vmem:[%s3 + $0x40] sm:$0xf]
    %v309 = vld [vmem:[%s3 + $0x44] sm:$0xf]
    %v310 = vld [vmem:[%s3 + $0x48] sm:$0xf]
    %v311 = vld [vmem:[%s3 + $0x4c] sm:$0xf]
    %v312 = vld [vmem:[%s3 + $0x50] sm:$0xf]
    %v313 = vld [vmem:[%s3 + $0x54] sm:$0xf]
    %v314 = vld [vmem:[%s3 + $0x58] sm:$0xf]
    %v315 = vld [vmem:[%s3 + $0x5c] sm:$0xf]
    %v316 = vld [vmem:[%s3 + $0x60] sm:$0xf]
    %v317 = vld [vmem:[%s3 + $0x64] sm:$0xf]
    %v318 = vld [vmem:[%s3 + $0x68] sm:$0xf]
    %v319 = vld [vmem:[%s3 + $0x6c] sm:$0xf]
    %v320 = vld [vmem:[%s3 + $0x70] sm:$0xf]
    %v321 = vld [vmem:[%s3 + $0x74] sm:$0xf]
    %v322 = vld [vmem:[%s3 + $0x78] sm:$0xf]
    %v323 = vld [vmem:[%s3 + $0x7c] sm:$0xf]
    %v324 = vld [vmem:[%s3 + $0x80] sm:$0xf]
    %v325 = vld [vmem:[%s3 + $0x84] sm:$0xf]
    %v326 = vld [vmem:[%s3 + $0x88] sm:$0xf]
    %v327 = vld [vmem:[%s3 + $0x8c] sm:$0xf]
    %v328 = vld [vmem:[%s3 + $0x90] sm:$0xf]
    %v329 = vld [vmem:[%s3 + $0x94] sm:$0xf]
    %v330 = vld [vmem:[%s3 + $0x98] sm:$0xf]
    %v331 = vld [vmem:[%s3 + $0x9c] sm:$0xf]
    %v332 = vld [vmem:[%s3 + $0xa0] sm:$0xf]
    %v333 = vld [vmem:[%s3 + $0xa4] sm:$0xf]
    %v334 = vld [vmem:[%s3 + $0xa8] sm:$0xf]
    %v335 = vld [vmem:[%s3 + $0xac] sm:$0xf]
    %v336 = vld [vmem:[%s3 + $0xb0] sm:$0xf]
    %v337 = vld [vmem:[%s3 + $0xb4] sm:$0xf]
    %v338 = vld [vmem:[%s3 + $0xb8] sm:$0xf]
    %v339 = vld [vmem:[%s3 + $0xbc] sm:$0xf]
    %v340 = vld [vmem:[%s3 + $0xc0] sm:$0xf]
    %v341 = vld [vmem:[%s3 + $0xc4] sm:$0xf]
    %v342 = vld [vmem:[%s3 + $0xc8] sm:$0xf]
    %v343 = vld [vmem:[%s3 + $0xcc] sm:$0xf]
    %v344 = vld [vmem:[%s3 + $0xd0] sm:$0xf]
    %v345 = vld [vmem:[%s3 + $0xd4] sm:$0xf]
    %v346 = vld [vmem:[%s3 + $0xd8] sm:$0xf]
    %v347 = vld [vmem:[%s3 + $0xdc] sm:$0xf]
    %v348 = vld [vmem:[%s3 + $0xe0] sm:$0xf]
    %v349 = vld [vmem:[%s3 + $0xe4] sm:$0xf]
    %v350 = vld [vmem:[%s3 + $0xe8] sm:$0xf]
    %v351 = vld [vmem:[%s3 + $0xec] sm:$0xf]
    %v352 = vld [vmem:[%s3 + $0xf0] sm:$0xf]
    %v353 = vld [vmem:[%s3 + $0xf4] sm:$0xf]
    %v354 = vld [vmem:[%s3 + $0xf8] sm:$0xf]
    %v355 = vld [vmem:[%s3 + $0xfc] sm:$0xf]
    %v420 = vunpack.c.l.b16 %v292
    %v421 = vunpack.c.l.b16 %v293
    %v422 = vunpack.c.l.b16 %v294
    %v423 = vunpack.c.l.b16 %v295
    %v424 = vunpack.c.l.b16 %v296
    %v425 = vunpack.c.l.b16 %v297
    %v426 = vunpack.c.l.b16 %v298
    %v427 = vunpack.c.l.b16 %v299
    %v428 = vunpack.c.l.b16 %v300
    %v429 = vunpack.c.l.b16 %v301
    %v430 = vunpack.c.l.b16 %v302
    %v431 = vunpack.c.l.b16 %v303
    %v432 = vunpack.c.l.b16 %v304
    %v433 = vunpack.c.l.b16 %v305
    %v434 = vunpack.c.l.b16 %v306
    %v435 = vunpack.c.l.b16 %v307
    %v436 = vunpack.c.l.b16 %v308
    %v437 = vunpack.c.l.b16 %v309
    %v438 = vunpack.c.l.b16 %v310
    %v439 = vunpack.c.l.b16 %v311
    %v440 = vunpack.c.l.b16 %v312
    %v441 = vunpack.c.l.b16 %v313
    %v442 = vunpack.c.l.b16 %v314
    %v443 = vunpack.c.l.b16 %v315
    %v444 = vunpack.c.l.b16 %v316
    %v445 = vunpack.c.l.b16 %v317
    %v446 = vunpack.c.l.b16 %v318
    %v447 = vunpack.c.l.b16 %v319
    %v448 = vunpack.c.l.b16 %v320
    %v449 = vunpack.c.l.b16 %v321
    %v450 = vunpack.c.l.b16 %v322
    %v451 = vunpack.c.l.b16 %v323
    %v452 = vunpack.c.l.b16 %v324
    %v453 = vunpack.c.l.b16 %v325
    %v454 = vunpack.c.l.b16 %v326
    %v455 = vunpack.c.l.b16 %v327
    %v456 = vunpack.c.l.b16 %v328
    %v457 = vunpack.c.l.b16 %v329
    %v458 = vunpack.c.l.b16 %v330
    %v459 = vunpack.c.l.b16 %v331
    %v460 = vunpack.c.l.b16 %v332
    %v461 = vunpack.c.l.b16 %v333
    %v462 = vunpack.c.l.b16 %v334
    %v463 = vunpack.c.l.b16 %v335
    %v464 = vunpack.c.l.b16 %v336
    %v465 = vunpack.c.l.b16 %v337
    %v466 = vunpack.c.l.b16 %v338
    %v467 = vunpack.c.l.b16 %v339
    %v468 = vunpack.c.l.b16 %v340
    %v469 = vunpack.c.l.b16 %v341
    %v470 = vunpack.c.l.b16 %v342
    %v471 = vunpack.c.l.b16 %v343
    %v472 = vunpack.c.l.b16 %v344
    %v473 = vunpack.c.l.b16 %v345
    %v474 = vunpack.c.l.b16 %v346
    %v475 = vunpack.c.l.b16 %v347
    %v476 = vunpack.c.l.b16 %v348
    %v477 = vunpack.c.l.b16 %v349
    %v478 = vunpack.c.l.b16 %v350
    %v479 = vunpack.c.l.b16 %v351
    %v480 = vunpack.c.l.b16 %v352
    %v481 = vunpack.c.l.b16 %v353
    %v482 = vunpack.c.l.b16 %v354
    %v483 = vunpack.c.l.b16 %v355
    %v484 = vpack.c.b16 %v421, %v420
    %v485 = vpack.c.b16 %v423, %v422
    %v486 = vpack.c.b16 %v425, %v424
    %v487 = vpack.c.b16 %v427, %v426
    %v488 = vpack.c.b16 %v429, %v428
    %v489 = vpack.c.b16 %v431, %v430
    %v490 = vpack.c.b16 %v433, %v432
    %v491 = vpack.c.b16 %v435, %v434
    %v492 = vpack.c.b16 %v437, %v436
    %v493 = vpack.c.b16 %v439, %v438
    %v494 = vpack.c.b16 %v441, %v440
    %v495 = vpack.c.b16 %v443, %v442
    %v496 = vpack.c.b16 %v445, %v444
    %v497 = vpack.c.b16 %v447, %v446
    %v498 = vpack.c.b16 %v449, %v448
    %v499 = vpack.c.b16 %v451, %v450
    %v500 = vpack.c.b16 %v453, %v452
    %v501 = vpack.c.b16 %v455, %v454
    %v502 = vpack.c.b16 %v457, %v456
    %v503 = vpack.c.b16 %v459, %v458
    %v504 = vpack.c.b16 %v461, %v460
    %v505 = vpack.c.b16 %v463, %v462
    %v506 = vpack.c.b16 %v465, %v464
    %v507 = vpack.c.b16 %v467, %v466
    %v508 = vpack.c.b16 %v469, %v468
    %v509 = vpack.c.b16 %v471, %v470
    %v510 = vpack.c.b16 %v473, %v472
    %v511 = vpack.c.b16 %v475, %v474
    %v512 = vpack.c.b16 %v477, %v476
    %v513 = vpack.c.b16 %v479, %v478
    %v514 = vpack.c.b16 %v481, %v480
    %v515 = vpack.c.b16 %v483, %v482
    %548 = vmatprep.subr.bf16.mxu0 0
    %549 = vmatpush1.bf16.msra.mxu0 %v491
    %550 = vmatprep.subr.bf16.mxu0 0
    %551 = vmatpush1.bf16.msra.mxu0 %v490
    %552 = vmatprep.subr.bf16.mxu0 0
    %553 = vmatpush1.bf16.msra.mxu0 %v489
    %554 = vmatprep.subr.bf16.mxu0 0
    %555 = vmatpush1.bf16.msra.mxu0 %v488
    %556 = vmatprep.subr.bf16.mxu0 0
    %557 = vmatpush1.bf16.msra.mxu0 %v487
    %558 = vmatprep.subr.bf16.mxu0 0
    %559 = vmatpush1.bf16.msra.mxu0 %v486
    %560 = vmatprep.subr.bf16.mxu0 0
    %561 = vmatpush1.bf16.msra.mxu0 %v485
    %562 = vmatprep.subr.bf16.mxu0 0
    %563 = vmatpush1.bf16.msra.mxu0 %v484
    %564 = vmatprep.subr.bf16.mxu0 0
    %565 = vmatpush2.bf16.msra.mxu0 %v499
    %566 = vmatprep.subr.bf16.mxu0 0
    %567 = vmatpush2.bf16.msra.mxu0 %v498
    %568 = vmatprep.subr.bf16.mxu0 0
    %569 = vmatpush2.bf16.msra.mxu0 %v497
    %570 = vmatprep.subr.bf16.mxu0 0
    %571 = vmatpush2.bf16.msra.mxu0 %v496
    %572 = vmatprep.subr.bf16.mxu0 0
    %573 = vmatpush2.bf16.msra.mxu0 %v495
    %574 = vmatprep.subr.bf16.mxu0 0
    %575 = vmatpush2.bf16.msra.mxu0 %v494
    %576 = vmatprep.subr.bf16.mxu0 0
    %577 = vmatpush2.bf16.msra.mxu0 %v493
    %578 = vmatprep.subr.bf16.mxu0 0
    %579 = vmatpush2.bf16.msra.mxu0 %v492
    %580 = vmatprep.mubr.bf16.mxu0 %v289
    %581 = vmatmul.mubr.bf16.gmra.mxu0 %v288
    %v582 = vpop.f32.mrf.mxu0
    %v583 = vadd.f32 0.0, %v582
    %v584 = vpop.f32.mrf.mxu0
    %v585 = vpop.f32.mrf.mxu0
    %v586 = vpop.f32.mrf.mxu0
    %587 = vdwg.mxu0
    %588 = vmatprep.subr.bf16.mxu0 0
    %589 = vmatpush1.bf16.msra.mxu0 %v507
    %590 = vmatprep.subr.bf16.mxu0 0
    %591 = vmatpush1.bf16.msra.mxu0 %v506
    %592 = vmatprep.subr.bf16.mxu0 0
    %593 = vmatpush1.bf16.msra.mxu0 %v505
    %594 = vmatprep.subr.bf16.mxu0 0
    %595 = vmatpush1.bf16.msra.mxu0 %v504
    %596 = vmatprep.subr.bf16.mxu0 0
    %597 = vmatpush1.bf16.msra.mxu0 %v503
    %598 = vmatprep.subr.bf16.mxu0 0
    %599 = vmatpush1.bf16.msra.mxu0 %v502
    %600 = vmatprep.subr.bf16.mxu0 0
    %601 = vmatpush1.bf16.msra.mxu0 %v501
    %602 = vmatprep.subr.bf16.mxu0 0
    %603 = vmatpush1.bf16.msra.mxu0 %v500
    %604 = vmatprep.subr.bf16.mxu0 0
    %605 = vmatpush2.bf16.msra.mxu0 %v515
    %606 = vmatprep.subr.bf16.mxu0 0
    %607 = vmatpush2.bf16.msra.mxu0 %v514
    %608 = vmatprep.subr.bf16.mxu0 0
    %609 = vmatpush2.bf16.msra.mxu0 %v513
    %610 = vmatprep.subr.bf16.mxu0 0
    %611 = vmatpush2.bf16.msra.mxu0 %v512
    %612 = vmatprep.subr.bf16.mxu0 0
    %613 = vmatpush2.bf16.msra.mxu0 %v511
    %614 = vmatprep.subr.bf16.mxu0 0
    %615 = vmatpush2.bf16.msra.mxu0 %v510
    %616 = vmatprep.subr.bf16.mxu0 0
    %617 = vmatpush2.bf16.msra.mxu0 %v509
    %618 = vmatprep.subr.bf16.mxu0 0
    %619 = vmatpush2.bf16.msra.mxu0 %v508
    %620 = vmatprep.mubr.bf16.mxu0 %v291
    %621 = vmatmul.mubr.bf16.gmra.mxu0 %v290
    %v622 = vpop.f32.mrf.mxu0
    %v623 = vadd.f32 %v583, %v622
    %v624 = vpop.f32.mrf.mxu0
    %v625 = vpop.f32.mrf.mxu0
    %v626 = vpop.f32.mrf.mxu0
    %627 = vdwg.mxu0
    %628 = vrot.lane.b32.xlu0 %v623, 9
    %v629 = vpop.permute.xlu0 %628
    %v630 = vld [vmem:[%s5] sm:$0x1]
    %v631 = vlaneseq
    %v632 = vshrl.u32 %v631, 7
    %v633 = vsub.s32 0, %v632
    %v634 = vrot.slane %v630, %v633
    %v635 = vmul.f32 %v629, %v634
    %v636 = vld [vmem:[%s4] sm:$0xff]
    %638 = vset.pattern.permute.xlu0 0
    %639 = vperm.xlu0 %638, %v636
    %v640 = vpop.permute.xlu0 %639
    %v642 = vmul.f32 %v635, %v640
    %643 = vrot.lane.b32.xlu0 %v623, 8
    %v644 = vpop.permute.xlu0 %643
    %v645 = vld [vmem:[%s5 + $0x1] sm:$0x1]
    %v646 = vlaneseq
    %v647 = vshrl.u32 %v646, 7
    %v648 = vsub.s32 0, %v647
    %v649 = vrot.slane %v645, %v648
    %v650 = vmul.f32 %v644, %v649
    %651 = vset.pattern.permute.xlu0 1
    %652 = vperm.xlu0 %651, %v636
    %v653 = vpop.permute.xlu0 %652
    %v655 = vmul.f32 %v650, %v653
    %v656 = vadd.f32 %v642, %v655
    %657 = vrot.lane.b32.xlu0 %v623, 7
    %v658 = vpop.permute.xlu0 %657
    %v659 = vld [vmem:[%s5 + $0x2] sm:$0x1]
    %v660 = vlaneseq
    %v661 = vshrl.u32 %v660, 7
    %v662 = vsub.s32 0, %v661
    %v663 = vrot.slane %v659, %v662
    %v664 = vmul.f32 %v658, %v663
    %665 = vset.pattern.permute.xlu0 2
    %666 = vperm.xlu0 %665, %v636
    %v667 = vpop.permute.xlu0 %666
    %v669 = vmul.f32 %v664, %v667
    %v670 = vadd.f32 %v656, %v669
    %671 = vrot.lane.b32.xlu0 %v623, 1
    %v672 = vpop.permute.xlu0 %671
    %v673 = vld [vmem:[%s5 + $0x3] sm:$0x1]
    %v674 = vlaneseq
    %v675 = vshrl.u32 %v674, 7
    %v676 = vsub.s32 0, %v675
    %v677 = vrot.slane %v673, %v676
    %v678 = vmul.f32 %v672, %v677
    %679 = vset.pattern.permute.xlu0 3
    %680 = vperm.xlu0 %679, %v636
    %v681 = vpop.permute.xlu0 %680
    %v683 = vmul.f32 %v678, %v681
    %v684 = vadd.f32 %v670, %v683
    %v685 = vld [vmem:[%s5 + $0x4] sm:$0x1]
    %v686 = vlaneseq
    %v687 = vshrl.u32 %v686, 7
    %v688 = vsub.s32 0, %v687
    %v689 = vrot.slane %v685, %v688
    %v690 = vmul.f32 %v623, %v689
    %691 = vset.pattern.permute.xlu0 4
    %692 = vperm.xlu0 %691, %v636
    %v693 = vpop.permute.xlu0 %692
    %v695 = vmul.f32 %v690, %v693
    %v696 = vadd.f32 %v684, %v695
    %697 = vrot.lane.b32.xlu0 %v623, 127
    %v698 = vpop.permute.xlu0 %697
    %v699 = vld [vmem:[%s5 + $0x5] sm:$0x1]
    %v700 = vlaneseq
    %v701 = vshrl.u32 %v700, 7
    %v702 = vsub.s32 0, %v701
    %v703 = vrot.slane %v699, %v702
    %v704 = vmul.f32 %v698, %v703
    %705 = vset.pattern.permute.xlu0 5
    %706 = vperm.xlu0 %705, %v636
    %v707 = vpop.permute.xlu0 %706
    %v709 = vmul.f32 %v704, %v707
    %v710 = vadd.f32 %v696, %v709
    %711 = vrot.lane.b32.xlu0 %v623, 121
    %v712 = vpop.permute.xlu0 %711
    %v713 = vld [vmem:[%s5 + $0x6] sm:$0x1]
    %v714 = vlaneseq
    %v715 = vshrl.u32 %v714, 7
    %v716 = vsub.s32 0, %v715
    %v717 = vrot.slane %v713, %v716
    %v718 = vmul.f32 %v712, %v717
    %719 = vset.pattern.permute.xlu0 6
    %720 = vperm.xlu0 %719, %v636
    %v721 = vpop.permute.xlu0 %720
    %v723 = vmul.f32 %v718, %v721
    %v724 = vadd.f32 %v710, %v723
    %725 = vrot.lane.b32.xlu0 %v623, 120
    %v726 = vpop.permute.xlu0 %725
    %v727 = vld [vmem:[%s5 + $0x7] sm:$0x1]
    %v728 = vlaneseq
    %v729 = vshrl.u32 %v728, 7
    %v730 = vsub.s32 0, %v729
    %v731 = vrot.slane %v727, %v730
    %v732 = vmul.f32 %v726, %v731
    %733 = vset.pattern.permute.xlu0 7
    %734 = vperm.xlu0 %733, %v636
    %v735 = vpop.permute.xlu0 %734
    %v737 = vmul.f32 %v732, %v735
    %v738 = vadd.f32 %v724, %v737
    %739 = vrot.lane.b32.xlu0 %v623, 119
    %v740 = vpop.permute.xlu0 %739
    %v741 = vld [vmem:[%s5 + $0x8] sm:$0x1]
    %v742 = vlaneseq
    %v743 = vshrl.u32 %v742, 7
    %v744 = vsub.s32 0, %v743
    %v745 = vrot.slane %v741, %v744
    %v746 = vmul.f32 %v740, %v745
    %747 = vset.pattern.permute.xlu0 8
    %748 = vperm.xlu0 %747, %v636
    %v749 = vpop.permute.xlu0 %748
    %v751 = vmul.f32 %v746, %v749
    %v752 = vadd.f32 %v738, %v751
    %v753 = vld [vmem:[%s6] sm:$0xff]
    %755 = vset.pattern.permute.xlu0 0
    %756 = vperm.xlu0 %755, %v753
    %v757 = vpop.permute.xlu0 %756
    %v759 = vadd.f32 %v752, %v757
    %v760 = vmax.f32 %v759, 0.0
    %v761 = vld [vmem:[%s7] sm:$0xf]
    %v762 = vld [vmem:[%s7 + $0x4] sm:$0xf]
    %v763 = vpack.c.bf16 %v760, %v760
    %v764 = vld [vmem:[%s8] sm:$0xff]
    %v765 = vld [vmem:[%s8 + $0x8] sm:$0xff]
    %767 = vset.pattern.permute.xlu0 0
    %768 = vperm.xlu0 %767, %v764
    %v769 = vpop.permute.xlu0 %768
    %772 = vset.pattern.permute.xlu0 0
    %773 = vperm.xlu0 %772, %v765
    %v774 = vpop.permute.xlu0 %773
    %v778 = vunpack.c.l.b16 %v761
    %v779 = vunpack.c.l.b16 %v762
    %v780 = vpack.c.b16 %v779, %v778
    %vm781 = vcmask 64512
    %v783 = vsel %vm781, %v780, 0
    %vm785 = vcmask 1043456
    %v787 = vsel %vm785, %v763, 0
    %789 = vmatprep.subr.bf16.mxu0 0
    %790 = vmatpush1.bf16.msra.mxu0 0
    %791 = vmatprep.subr.bf16.mxu0 0
    %792 = vmatpush1.bf16.msra.mxu0 0
    %793 = vmatprep.subr.bf16.mxu0 0
    %794 = vmatpush1.bf16.msra.mxu0 0
    %795 = vmatprep.subr.bf16.mxu0 0
    %796 = vmatpush1.bf16.msra.mxu0 0
    %797 = vmatprep.subr.bf16.mxu0 0
    %798 = vmatpush1.bf16.msra.mxu0 0
    %799 = vmatprep.subr.bf16.mxu0 0
    %800 = vmatpush1.bf16.msra.mxu0 0
    %801 = vmatprep.subr.bf16.mxu0 0
    %802 = vmatpush1.bf16.msra.mxu0 0
    %803 = vmatprep.subr.bf16.mxu0 0
    %804 = vmatpush1.bf16.msra.mxu0 %v787
    %805 = vmatprep.subr.bf16.mxu0 0
    %806 = vmatpush2.bf16.msra.mxu0 0
    %807 = vmatprep.subr.bf16.mxu0 0
    %808 = vmatpush2.bf16.msra.mxu0 0
    %809 = vmatprep.subr.bf16.mxu0 0
    %810 = vmatpush2.bf16.msra.mxu0 0
    %811 = vmatprep.subr.bf16.mxu0 0
    %812 = vmatpush2.bf16.msra.mxu0 0
    %813 = vmatprep.subr.bf16.mxu0 0
    %814 = vmatpush2.bf16.msra.mxu0 0
    %815 = vmatprep.subr.bf16.mxu0 0
    %816 = vmatpush2.bf16.msra.mxu0 0
    %817 = vmatprep.subr.bf16.mxu0 0
    %818 = vmatpush2.bf16.msra.mxu0 0
    %819 = vmatprep.subr.bf16.mxu0 0
    %820 = vmatpush2.bf16.msra.mxu0 0
    %821 = vmatprep.mubr.bf16.mxu0 0
    %822 = vmatmul.mubr.bf16.gmra.mxu0 %v783
    %v823 = vpop.f32.mrf.mxu0
    %v824 = vadd.f32 %v769, %v823
    %v825 = vpop.f32.mrf.mxu0
    %v826 = vpop.f32.mrf.mxu0
    %v827 = vadd.f32 %v774, %v826
    %v828 = vpop.f32.mrf.mxu0
    %829 = vdwg.mxu0
    %v830 = vmax.f32 %v824, 0.0
    %v831 = vmax.f32 %v827, 0.0
    %832 = vrot.lane.b32.xlu0 %v830, 127
    %v833 = vpop.permute.xlu0 %832
    %834 = vrot.lane.b32.xlu0 %v831, 127
    %v835 = vpop.permute.xlu0 %834
    %v836 = vmax.f32 %v830, %v833
    %v837 = vmax.f32 %v831, %v835
    %838 = vrot.lane.b32.xlu0 %v830, 120
    %v839 = vpop.permute.xlu0 %838
    %840 = vrot.lane.b32.xlu0 %v831, 120
    %v841 = vpop.permute.xlu0 %840
    %842 = vrot.lane.b32.xlu0 %v830, 119
    %v843 = vpop.permute.xlu0 %842
    %844 = vrot.lane.b32.xlu0 %v831, 119
    %v845 = vpop.permute.xlu0 %844
    %v846 = vmax.f32 %v839, %v843
    %v847 = vmax.f32 %v841, %v845
    %v848 = vmax.f32 %v836, %v846
    %v849 = vmax.f32 %v837, %v847
    %v850 = vpack.c.bf16 %v849, %v848
    %v851 = vld [vmem:[%s10] sm:$0xf]
    %v852 = vld [vmem:[%s10 + $0x4] sm:$0xf]
    %v853 = vld [vmem:[%s10 + $0x8] sm:$0xf]
    %v854 = vld [vmem:[%s10 + $0xc] sm:$0xf]
    %v855 = vld [vmem:[%s10 + $0x10] sm:$0xf]
    %v856 = vld [vmem:[%s10 + $0x14] sm:$0xf]
    %v857 = vld [vmem:[%s10 + $0x18] sm:$0xf]
    %v858 = vld [vmem:[%s10 + $0x1c] sm:$0xf]
    %v859 = vld [vmem:[%s10 + $0x20] sm:$0xf]
    %v860 = vld [vmem:[%s10 + $0x24] sm:$0xf]
    %v861 = vld [vmem:[%s10 + $0x28] sm:$0xf]
    %v862 = vld [vmem:[%s10 + $0x2c] sm:$0xf]
    %v863 = vld [vmem:[%s10 + $0x30] sm:$0xf]
    %v864 = vld [vmem:[%s10 + $0x34] sm:$0xf]
    %v865 = vld [vmem:[%s10 + $0x38] sm:$0xf]
    %v866 = vld [vmem:[%s10 + $0x3c] sm:$0xf]
    %v883 = vunpack.c.l.b16 %v851
    %v884 = vunpack.c.l.b16 %v852
    %v885 = vunpack.c.l.b16 %v853
    %v886 = vunpack.c.l.b16 %v854
    %v887 = vunpack.c.l.b16 %v855
    %v888 = vunpack.c.l.b16 %v856
    %v889 = vunpack.c.l.b16 %v857
    %v890 = vunpack.c.l.b16 %v858
    %v891 = vunpack.c.l.b16 %v859
    %v892 = vunpack.c.l.b16 %v860
    %v893 = vunpack.c.l.b16 %v861
    %v894 = vunpack.c.l.b16 %v862
    %v895 = vunpack.c.l.b16 %v863
    %v896 = vunpack.c.l.b16 %v864
    %v897 = vunpack.c.l.b16 %v865
    %v898 = vunpack.c.l.b16 %v866
    %v899 = vpack.c.b16 %v884, %v883
    %v900 = vpack.c.b16 %v886, %v885
    %v901 = vpack.c.b16 %v888, %v887
    %v902 = vpack.c.b16 %v890, %v889
    %v903 = vpack.c.b16 %v892, %v891
    %v904 = vpack.c.b16 %v894, %v893
    %v905 = vpack.c.b16 %v896, %v895
    %v906 = vpack.c.b16 %v898, %v897
    %915 = vmatprep.subr.bf16.mxu0 0
    %916 = vmatpush1.bf16.msra.mxu0 %v906
    %917 = vmatprep.subr.bf16.mxu0 0
    %918 = vmatpush1.bf16.msra.mxu0 %v905
    %919 = vmatprep.subr.bf16.mxu0 0
    %920 = vmatpush1.bf16.msra.mxu0 %v904
    %921 = vmatprep.subr.bf16.mxu0 0
    %922 = vmatpush1.bf16.msra.mxu0 %v903
    %923 = vmatprep.subr.bf16.mxu0 0
    %924 = vmatpush1.bf16.msra.mxu0 %v902
    %925 = vmatprep.subr.bf16.mxu0 0
    %926 = vmatpush1.bf16.msra.mxu0 %v901
    %927 = vmatprep.subr.bf16.mxu0 0
    %928 = vmatpush1.bf16.msra.mxu0 %v900
    %929 = vmatprep.subr.bf16.mxu0 0
    %930 = vmatpush1.bf16.msra.mxu0 %v899
    %931 = vmatprep.subr.bf16.mxu0 0
    %932 = vmatpush2.bf16.msra.mxu0 0
    %933 = vmatprep.subr.bf16.mxu0 0
    %934 = vmatpush2.bf16.msra.mxu0 0
    %935 = vmatprep.subr.bf16.mxu0 0
    %936 = vmatpush2.bf16.msra.mxu0 0
    %937 = vmatprep.subr.bf16.mxu0 0
    %938 = vmatpush2.bf16.msra.mxu0 0
    %939 = vmatprep.subr.bf16.mxu0 0
    %940 = vmatpush2.bf16.msra.mxu0 0
    %941 = vmatprep.subr.bf16.mxu0 0
    %942 = vmatpush2.bf16.msra.mxu0 0
    %943 = vmatprep.subr.bf16.mxu0 0
    %944 = vmatpush2.bf16.msra.mxu0 0
    %945 = vmatprep.subr.bf16.mxu0 0
    %946 = vmatpush2.bf16.msra.mxu0 0
    %947 = vmatprep.mubr.bf16.mxu0 0
    %948 = vmatmul.mubr.bf16.gmra.mxu0 %v850
    %v949 = vpop.f32.mrf.mxu0
    %v950 = vadd.f32 0.0, %v949
    %v951 = vpop.f32.mrf.mxu0
    %v952 = vpop.f32.mrf.mxu0
    %v953 = vadd.f32 0.0, %v952
    %v954 = vpop.f32.mrf.mxu0
    %955 = vdwg.mxu0
    %v956 = vld [vmem:[%s11] sm:$0xf]
    %v957 = vld [vmem:[%s11 + $0x4] sm:$0xf]
    %v958 = vld [vmem:[%s11 + $0x8] sm:$0xf]
    %v959 = vld [vmem:[%s11 + $0xc] sm:$0xf]
    %v960 = vpack.c.bf16 %v953, %v950
    %v961 = vld [vmem:[%s12] sm:$0xff]
    %v962 = vld [vmem:[%s12 + $0x8] sm:$0xff]
    %v963 = vld [vmem:[%s12 + $0x10] sm:$0xff]
    %v964 = vld [vmem:[%s12 + $0x18] sm:$0xff]
    %966 = vset.pattern.permute.xlu0 0
    %967 = vperm.xlu0 %966, %v961
    %v968 = vpop.permute.xlu0 %967
    %971 = vset.pattern.permute.xlu0 0
    %972 = vperm.xlu0 %971, %v962
    %v973 = vpop.permute.xlu0 %972
    %976 = vset.pattern.permute.xlu0 0
    %977 = vperm.xlu0 %976, %v963
    %v978 = vpop.permute.xlu0 %977
    %981 = vset.pattern.permute.xlu0 0
    %982 = vperm.xlu0 %981, %v964
    %v983 = vpop.permute.xlu0 %982
    %v989 = vunpack.c.l.b16 %v956
    %v990 = vunpack.c.l.b16 %v957
    %v991 = vunpack.c.l.b16 %v958
    %v992 = vunpack.c.l.b16 %v959
    %v993 = vpack.c.b16 %v990, %v989
    %v994 = vpack.c.b16 %v992, %v991
    %vm995 = vcmask 130048
    %v997 = vsel %vm995, %v993, 0
    %v1000 = vsel %vm995, %v994, 0
    %1002 = vmatprep.subr.bf16.mxu0 0
    %1003 = vmatpush1.bf16.msra.mxu0 0
    %1004 = vmatprep.subr.bf16.mxu0 0
    %1005 = vmatpush1.bf16.msra.mxu0 0
    %1006 = vmatprep.subr.bf16.mxu0 0
    %1007 = vmatpush1.bf16.msra.mxu0 0
    %1008 = vmatprep.subr.bf16.mxu0 0
    %1009 = vmatpush1.bf16.msra.mxu0 0
    %1010 = vmatprep.subr.bf16.mxu0 0
    %1011 = vmatpush1.bf16.msra.mxu0 0
    %1012 = vmatprep.subr.bf16.mxu0 0
    %1013 = vmatpush1.bf16.msra.mxu0 0
    %1014 = vmatprep.subr.bf16.mxu0 0
    %1015 = vmatpush1.bf16.msra.mxu0 0
    %1016 = vmatprep.subr.bf16.mxu0 0
    %1017 = vmatpush1.bf16.msra.mxu0 %v960
    %1018 = vmatprep.subr.bf16.mxu0 0
    %1019 = vmatpush2.bf16.msra.mxu0 0
    %1020 = vmatprep.subr.bf16.mxu0 0
    %1021 = vmatpush2.bf16.msra.mxu0 0
    %1022 = vmatprep.subr.bf16.mxu0 0
    %1023 = vmatpush2.bf16.msra.mxu0 0
    %1024 = vmatprep.subr.bf16.mxu0 0
    %1025 = vmatpush2.bf16.msra.mxu0 0
    %1026 = vmatprep.subr.bf16.mxu0 0
    %1027 = vmatpush2.bf16.msra.mxu0 0
    %1028 = vmatprep.subr.bf16.mxu0 0
    %1029 = vmatpush2.bf16.msra.mxu0 0
    %1030 = vmatprep.subr.bf16.mxu0 0
    %1031 = vmatpush2.bf16.msra.mxu0 0
    %1032 = vmatprep.subr.bf16.mxu0 0
    %1033 = vmatpush2.bf16.msra.mxu0 0
    %1034 = vmatprep.mubr.bf16.mxu0 0
    %1035 = vmatmul.mubr.bf16.gmra.mxu0 %v997
    %v1036 = vpop.f32.mrf.mxu0
    %v1037 = vadd.f32 %v968, %v1036
    %v1038 = vpop.f32.mrf.mxu0
    %v1039 = vpop.f32.mrf.mxu0
    %v1040 = vadd.f32 %v973, %v1039
    %v1041 = vpop.f32.mrf.mxu0
    %1042 = vmatprep.mubr.bf16.mxu0 0
    %1043 = vmatmul.mubr.bf16.gmra.mxu0 %v1000
    %v1044 = vpop.f32.mrf.mxu0
    %v1045 = vadd.f32 %v978, %v1044
    %v1046 = vpop.f32.mrf.mxu0
    %v1047 = vpop.f32.mrf.mxu0
    %v1048 = vadd.f32 %v983, %v1047
    %v1049 = vpop.f32.mrf.mxu0
    %1050 = vdwg.mxu0
    %v1051 = vmax.f32 %v1037, 0.0
    %v1052 = vmax.f32 %v1040, 0.0
    %v1053 = vmax.f32 %v1045, 0.0
    %v1054 = vmax.f32 %v1048, 0.0
    %v1055 = vld [vmem:[%s13] sm:$0x7]
    %v1056 = vpack.c.bf16 %v1052, %v1051
    %v1057 = vpack.c.bf16 %v1054, %v1053
    %v1058 = vld [vmem:[%s14] sm:$0x3f]
    %1060 = vset.pattern.permute.xlu0 0
    %1061 = vperm.xlu0 %1060, %v1058
    %v1062 = vpop.permute.xlu0 %1061
    %vm1064 = vcmask 261120
    %v1066 = vsel %vm1064, %v1055, 0
    %1068 = vmatprep.subr.bf16.mxu0 0
    %1069 = vmatpush1.bf16.msra.mxu0 0
    %1070 = vmatprep.subr.bf16.mxu0 0
    %1071 = vmatpush1.bf16.msra.mxu0 0
    %1072 = vmatprep.subr.bf16.mxu0 0
    %1073 = vmatpush1.bf16.msra.mxu0 0
    %1074 = vmatprep.subr.bf16.mxu0 0
    %1075 = vmatpush1.bf16.msra.mxu0 0
    %1076 = vmatprep.subr.bf16.mxu0 0
    %1077 = vmatpush1.bf16.msra.mxu0 0
    %1078 = vmatprep.subr.bf16.mxu0 0
    %1079 = vmatpush1.bf16.msra.mxu0 0
    %1080 = vmatprep.subr.bf16.mxu0 0
    %1081 = vmatpush1.bf16.msra.mxu0 %v1057
    %1082 = vmatprep.subr.bf16.mxu0 0
    %1083 = vmatpush1.bf16.msra.mxu0 %v1056
    %1084 = vmatprep.subr.bf16.mxu0 0
    %1085 = vmatpush2.bf16.msra.mxu0 0
    %1086 = vmatprep.subr.bf16.mxu0 0
    %1087 = vmatpush2.bf16.msra.mxu0 0
    %1088 = vmatprep.subr.bf16.mxu0 0
    %1089 = vmatpush2.bf16.msra.mxu0 0
    %1090 = vmatprep.subr.bf16.mxu0 0
    %1091 = vmatpush2.bf16.msra.mxu0 0
    %1092 = vmatprep.subr.bf16.mxu0 0
    %1093 = vmatpush2.bf16.msra.mxu0 0
    %1094 = vmatprep.subr.bf16.mxu0 0
    %1095 = vmatpush2.bf16.msra.mxu0 0
    %1096 = vmatprep.subr.bf16.mxu0 0
    %1097 = vmatpush2.bf16.msra.mxu0 0
    %1098 = vmatprep.subr.bf16.mxu0 0
    %1099 = vmatpush2.bf16.msra.mxu0 0
    %1100 = vmatprep.mubr.bf16.mxu0 0
    %1101 = vmatmul.mubr.bf16.gmra.mxu0 %v1066
    %v1102 = vpop.f32.mrf.mxu0
    %v1103 = vadd.f32 %v1062, %v1102
    %v1104 = vpop.f32.mrf.mxu0
    %v1105 = vpop.f32.mrf.mxu0
    %v1106 = vpop.f32.mrf.mxu0
    %1107 = vdwg.mxu0
    %vm1108 = vcmask 13312
    %v1109 = vsel %vm1108, %v1103, -inf
    %v1110 = vrot.slane %v1109, 4
    %v1111 = vmax.f32 %v1109, %v1110
    %v1112 = vrot.slane %v1111, 2
    %v1113 = vmax.f32 %v1111, %v1112
    %v1114 = vrot.slane %v1113, 1
    %v1115 = vmax.f32 %v1113, %v1114
    %v1116 = vsub.f32 %v1103, %v1115
    %v1117 = vmul.f32 %v1116, 1.442695
    %v1118 = vpow.pop %v1117
    %v1119 = vsel %vm1108, %v1118, 0.0
    %v1120 = vrot.slane %v1119, 4
    %v1121 = vadd.f32 %v1119, %v1120
    %v1122 = vrot.slane %v1121, 2
    %v1123 = vadd.f32 %v1121, %v1122
    %v1124 = vrot.slane %v1123, 1
    %v1125 = vadd.f32 %v1123, %v1124
    %v1126 = vrcp.pop %v1125
    %v1127 = vmul.f32 1.0, %v1126
    %vm1128 = vcmask 15360
    %v1129 = vsel %vm1128, %v1127, inf
    %1130 = vmin.xlane.f32.xlu0 %v1129
    %v1131 = vpop.xlane.xlu0 %1130
    %vm1132 = vcmp.ge.f32.partialorder %v1131, 0.5
    %v1133 = vsel %vm1132, 1, 0
    %vm1134 = vcmask 0
    %1135 = vst.msk [vmem:[#allocation2] sm:$0x1] %vm1134, %v1133
    %v1136 = vld [vmem:[#allocation2] sm:$0x1]
    %s1137 = vtos %v1136
    %s1138 = scalar_lea.smem [#allocation3], 0
    %1139 = sst [smem:[%s1138]] %s1137
    %p1140 = scmp.eq.s32.totalorder %s1137, 1
    // Predicated region
    $region94: #{_forward_impl.1} parent=1 // pred_check
      %p1141 = pneg %p1140
    $region95: #{_forward_impl.1} parent=1 // pred_check_branch
      %1143 = sbr.rel (%p1141) target = $region97
    $region96: #{_forward_impl.1} parent=1 // pred_region
      %1144 = vst.msk [vmem:[%s23] sm:$0x3f] %vm1108, %v1103
    $region97: #{_forward_impl.1} parent=1 // pred_fallthru
      _
    %p1145 = scmp.eq.s32.totalorder %s1137, 0
    // Predicated region
    $region98: #{_forward_impl.1} parent=1 // pred_check
      %p1146 = pneg %p1145
    $region99: #{_forward_impl.1} parent=1 // pred_check_branch
      %1148 = sbr.rel (%p1146) target = $region101
    $region100: #{_forward_impl.1} parent=1 // pred_region
      %v1149 = vld [vmem:[%s9] sm:$0xf]
      %v1150 = vld [vmem:[%s9 + $0x4] sm:$0xf]
      %v1151 = vld [vmem:[%s9 + $0x8] sm:$0xf]
      %v1152 = vld [vmem:[%s9 + $0xc] sm:$0xf]
      %v1153 = vld [vmem:[%s9 + $0x10] sm:$0xf]
      %v1154 = vld [vmem:[%s9 + $0x14] sm:$0xf]
      %v1155 = vld [vmem:[%s9 + $0x18] sm:$0xf]
      %v1156 = vld [vmem:[%s9 + $0x1c] sm:$0xf]
      %v1157 = vld [vmem:[%s9 + $0x20] sm:$0xf]
      %v1158 = vld [vmem:[%s9 + $0x24] sm:$0xf]
      %v1159 = vld [vmem:[%s9 + $0x28] sm:$0xf]
      %v1160 = vld [vmem:[%s9 + $0x2c] sm:$0xf]
      %v1161 = vld [vmem:[%s9 + $0x30] sm:$0xf]
      %v1162 = vld [vmem:[%s9 + $0x34] sm:$0xf]
      %v1163 = vld [vmem:[%s9 + $0x38] sm:$0xf]
      %v1164 = vld [vmem:[%s9 + $0x3c] sm:$0xf]
      %v1181 = vunpack.c.l.b16 %v1149
      %v1182 = vunpack.c.l.b16 %v1150
      %v1183 = vunpack.c.l.b16 %v1151
      %v1184 = vunpack.c.l.b16 %v1152
      %v1185 = vunpack.c.l.b16 %v1153
      %v1186 = vunpack.c.l.b16 %v1154
      %v1187 = vunpack.c.l.b16 %v1155
      %v1188 = vunpack.c.l.b16 %v1156
      %v1189 = vunpack.c.l.b16 %v1157
      %v1190 = vunpack.c.l.b16 %v1158
      %v1191 = vunpack.c.l.b16 %v1159
      %v1192 = vunpack.c.l.b16 %v1160
      %v1193 = vunpack.c.l.b16 %v1161
      %v1194 = vunpack.c.l.b16 %v1162
      %v1195 = vunpack.c.l.b16 %v1163
      %v1196 = vunpack.c.l.b16 %v1164
      %v1197 = vpack.c.b16 %v1182, %v1181
      %v1198 = vpack.c.b16 %v1184, %v1183
      %v1199 = vpack.c.b16 %v1186, %v1185
      %v1200 = vpack.c.b16 %v1188, %v1187
      %v1201 = vpack.c.b16 %v1190, %v1189
      %v1202 = vpack.c.b16 %v1192, %v1191
      %v1203 = vpack.c.b16 %v1194, %v1193
      %v1204 = vpack.c.b16 %v1196, %v1195
      %1213 = vmatprep.subr.bf16.mxu0 0
      %1214 = vmatpush1.bf16.msra.mxu0 %v1204
      %1215 = vmatprep.subr.bf16.mxu0 0
      %1216 = vmatpush1.bf16.msra.mxu0 %v1203
      %1217 = vmatprep.subr.bf16.mxu0 0
      %1218 = vmatpush1.bf16.msra.mxu0 %v1202
      %1219 = vmatprep.subr.bf16.mxu0 0
      %1220 = vmatpush1.bf16.msra.mxu0 %v1201
      %1221 = vmatprep.subr.bf16.mxu0 0
      %1222 = vmatpush1.bf16.msra.mxu0 %v1200
      %1223 = vmatprep.subr.bf16.mxu0 0
      %1224 = vmatpush1.bf16.msra.mxu0 %v1199
      %1225 = vmatprep.subr.bf16.mxu0 0
      %1226 = vmatpush1.bf16.msra.mxu0 %v1198
      %1227 = vmatprep.subr.bf16.mxu0 0
      %1228 = vmatpush1.bf16.msra.mxu0 %v1197
      %1229 = vmatprep.subr.bf16.mxu0 0
      %1230 = vmatpush2.bf16.msra.mxu0 0
      %1231 = vmatprep.subr.bf16.mxu0 0
      %1232 = vmatpush2.bf16.msra.mxu0 0
      %1233 = vmatprep.subr.bf16.mxu0 0
      %1234 = vmatpush2.bf16.msra.mxu0 0
      %1235 = vmatprep.subr.bf16.mxu0 0
      %1236 = vmatpush2.bf16.msra.mxu0 0
      %1237 = vmatprep.subr.bf16.mxu0 0
      %1238 = vmatpush2.bf16.msra.mxu0 0
      %1239 = vmatprep.subr.bf16.mxu0 0
      %1240 = vmatpush2.bf16.msra.mxu0 0
      %1241 = vmatprep.subr.bf16.mxu0 0
      %1242 = vmatpush2.bf16.msra.mxu0 0
      %1243 = vmatprep.subr.bf16.mxu0 0
      %1244 = vmatpush2.bf16.msra.mxu0 0
      %1245 = vmatprep.mubr.bf16.mxu0 0
      %1246 = vmatmul.mubr.bf16.gmra.mxu0 %v850
      %v1247 = vpop.f32.mrf.mxu0
      %v1248 = vadd.f32 0.0, %v1247
      %v1249 = vpop.f32.mrf.mxu0
      %v1250 = vpop.f32.mrf.mxu0
      %v1251 = vadd.f32 0.0, %v1250
      %v1252 = vpop.f32.mrf.mxu0
      %1253 = vdwg.mxu0
      %1256 = vrot.lane.b32.xlu0 %v1248, 5
      %v1257 = vpop.permute.xlu0 %1256
      %1258 = vrot.lane.b32.xlu0 %v1251, 5
      %v1259 = vpop.permute.xlu0 %1258
      %vm1262 = vcmask 39936
      %v1263 = vsel %vm1262, 0.0, %v1257
      %v1264 = vsel %vm1262, 0.0, %v1259
      %v1265 = vld [vmem:[%s16] sm:$0x1]
      %v1266 = vlaneseq
      %v1267 = vshrl.u32 %v1266, 7
      %v1268 = vsub.s32 0, %v1267
      %v1269 = vrot.slane %v1265, %v1268
      %v1270 = vmul.f32 %v1263, %v1269
      %v1271 = vmul.f32 %v1264, %v1269
      %v1272 = vld [vmem:[%s15] sm:$0xff]
      %v1273 = vld [vmem:[%s15 + $0x8] sm:$0xff]
      %1275 = vset.pattern.permute.xlu0 0
      %1276 = vperm.xlu0 %1275, %v1272
      %v1277 = vpop.permute.xlu0 %1276
      %1280 = vset.pattern.permute.xlu0 0
      %1281 = vperm.xlu0 %1280, %v1273
      %v1282 = vpop.permute.xlu0 %1281
      %v1284 = vmul.f32 %v1270, %v1277
      %v1285 = vmul.f32 %v1271, %v1282
      %1286 = vrot.lane.b32.xlu0 %v1248, 4
      %v1287 = vpop.permute.xlu0 %1286
      %1288 = vrot.lane.b32.xlu0 %v1251, 4
      %v1289 = vpop.permute.xlu0 %1288
      %vm1292 = vcmask 31744
      %v1293 = vsel %vm1292, 0.0, %v1287
      %v1294 = vsel %vm1292, 0.0, %v1289
      %v1295 = vld [vmem:[%s16 + $0x1] sm:$0x1]
      %v1296 = vlaneseq
      %v1297 = vshrl.u32 %v1296, 7
      %v1298 = vsub.s32 0, %v1297
      %v1299 = vrot.slane %v1295, %v1298
      %v1300 = vmul.f32 %v1293, %v1299
      %v1301 = vmul.f32 %v1294, %v1299
      %1302 = vset.pattern.permute.xlu0 1
      %1303 = vperm.xlu0 %1302, %v1272
      %v1304 = vpop.permute.xlu0 %1303
      %1306 = vset.pattern.permute.xlu0 1
      %1307 = vperm.xlu0 %1306, %v1273
      %v1308 = vpop.permute.xlu0 %1307
      %v1310 = vmul.f32 %v1300, %v1304
      %v1311 = vmul.f32 %v1301, %v1308
      %v1312 = vadd.f32 %v1284, %v1310
      %v1313 = vadd.f32 %v1285, %v1311
      %1314 = vrot.lane.b32.xlu0 %v1248, 3
      %v1315 = vpop.permute.xlu0 %1314
      %1316 = vrot.lane.b32.xlu0 %v1251, 3
      %v1317 = vpop.permute.xlu0 %1316
      %vm1320 = vcmask 23552
      %v1321 = vsel %vm1320, 0.0, %v1315
      %v1322 = vsel %vm1320, 0.0, %v1317
      %v1323 = vld [vmem:[%s16 + $0x2] sm:$0x1]
      %v1324 = vlaneseq
      %v1325 = vshrl.u32 %v1324, 7
      %v1326 = vsub.s32 0, %v1325
      %v1327 = vrot.slane %v1323, %v1326
      %v1328 = vmul.f32 %v1321, %v1327
      %v1329 = vmul.f32 %v1322, %v1327
      %1330 = vset.pattern.permute.xlu0 2
      %1331 = vperm.xlu0 %1330, %v1272
      %v1332 = vpop.permute.xlu0 %1331
      %1334 = vset.pattern.permute.xlu0 2
      %1335 = vperm.xlu0 %1334, %v1273
      %v1336 = vpop.permute.xlu0 %1335
      %v1338 = vmul.f32 %v1328, %v1332
      %v1339 = vmul.f32 %v1329, %v1336
      %v1340 = vadd.f32 %v1312, %v1338
      %v1341 = vadd.f32 %v1313, %v1339
      %1342 = vrot.lane.b32.xlu0 %v1248, 1
      %v1343 = vpop.permute.xlu0 %1342
      %1344 = vrot.lane.b32.xlu0 %v1251, 1
      %v1345 = vpop.permute.xlu0 %1344
      %vm1348 = vcmask 7168
      %v1349 = vsel %vm1348, 0.0, %v1343
      %v1350 = vsel %vm1348, 0.0, %v1345
      %v1351 = vld [vmem:[%s16 + $0x3] sm:$0x1]
      %v1352 = vlaneseq
      %v1353 = vshrl.u32 %v1352, 7
      %v1354 = vsub.s32 0, %v1353
      %v1355 = vrot.slane %v1351, %v1354
      %v1356 = vmul.f32 %v1349, %v1355
      %v1357 = vmul.f32 %v1350, %v1355
      %1358 = vset.pattern.permute.xlu0 3
      %1359 = vperm.xlu0 %1358, %v1272
      %v1360 = vpop.permute.xlu0 %1359
      %1362 = vset.pattern.permute.xlu0 3
      %1363 = vperm.xlu0 %1362, %v1273
      %v1364 = vpop.permute.xlu0 %1363
      %v1366 = vmul.f32 %v1356, %v1360
      %v1367 = vmul.f32 %v1357, %v1364
      %v1368 = vadd.f32 %v1340, %v1366
      %v1369 = vadd.f32 %v1341, %v1367
      %v1370 = vld [vmem:[%s16 + $0x4] sm:$0x1]
      %v1371 = vlaneseq
      %v1372 = vshrl.u32 %v1371, 7
      %v1373 = vsub.s32 0, %v1372
      %v1374 = vrot.slane %v1370, %v1373
      %v1375 = vmul.f32 %v1248, %v1374
      %v1376 = vmul.f32 %v1251, %v1374
      %1377 = vset.pattern.permute.xlu0 4
      %1378 = vperm.xlu0 %1377, %v1272
      %v1379 = vpop.permute.xlu0 %1378
      %1381 = vset.pattern.permute.xlu0 4
      %1382 = vperm.xlu0 %1381, %v1273
      %v1383 = vpop.permute.xlu0 %1382
      %v1385 = vmul.f32 %v1375, %v1379
      %v1386 = vmul.f32 %v1376, %v1383
      %v1387 = vadd.f32 %v1368, %v1385
      %v1388 = vadd.f32 %v1369, %v1386
      %1389 = vrot.lane.b32.xlu0 %v1248, 127
      %v1390 = vpop.permute.xlu0 %1389
      %1391 = vrot.lane.b32.xlu0 %v1251, 127
      %v1392 = vpop.permute.xlu0 %1391
      %vm1395 = vcmask 252928
      %v1396 = vsel %vm1395, %v1390, 0.0
      %v1397 = vsel %vm1395, %v1392, 0.0
      %v1398 = vld [vmem:[%s16 + $0x5] sm:$0x1]
      %v1399 = vlaneseq
      %v1400 = vshrl.u32 %v1399, 7
      %v1401 = vsub.s32 0, %v1400
      %v1402 = vrot.slane %v1398, %v1401
      %v1403 = vmul.f32 %v1396, %v1402
      %v1404 = vmul.f32 %v1397, %v1402
      %1405 = vset.pattern.permute.xlu0 5
      %1406 = vperm.xlu0 %1405, %v1272
      %v1407 = vpop.permute.xlu0 %1406
      %1409 = vset.pattern.permute.xlu0 5
      %1410 = vperm.xlu0 %1409, %v1273
      %v1411 = vpop.permute.xlu0 %1410
      %v1413 = vmul.f32 %v1403, %v1407
      %v1414 = vmul.f32 %v1404, %v1411
      %v1415 = vadd.f32 %v1387, %v1413
      %v1416 = vadd.f32 %v1388, %v1414
      %1417 = vrot.lane.b32.xlu0 %v1248, 125
      %v1418 = vpop.permute.xlu0 %1417
      %1419 = vrot.lane.b32.xlu0 %v1251, 125
      %v1420 = vpop.permute.xlu0 %1419
      %vm1423 = vcmask 236544
      %v1424 = vsel %vm1423, %v1418, 0.0
      %v1425 = vsel %vm1423, %v1420, 0.0
      %v1426 = vld [vmem:[%s16 + $0x6] sm:$0x1]
      %v1427 = vlaneseq
      %v1428 = vshrl.u32 %v1427, 7
      %v1429 = vsub.s32 0, %v1428
      %v1430 = vrot.slane %v1426, %v1429
      %v1431 = vmul.f32 %v1424, %v1430
      %v1432 = vmul.f32 %v1425, %v1430
      %1433 = vset.pattern.permute.xlu0 6
      %1434 = vperm.xlu0 %1433, %v1272
      %v1435 = vpop.permute.xlu0 %1434
      %1437 = vset.pattern.permute.xlu0 6
      %1438 = vperm.xlu0 %1437, %v1273
      %v1439 = vpop.permute.xlu0 %1438
      %v1441 = vmul.f32 %v1431, %v1435
      %v1442 = vmul.f32 %v1432, %v1439
      %v1443 = vadd.f32 %v1415, %v1441
      %v1444 = vadd.f32 %v1416, %v1442
      %1445 = vrot.lane.b32.xlu0 %v1248, 124
      %v1446 = vpop.permute.xlu0 %1445
      %1447 = vrot.lane.b32.xlu0 %v1251, 124
      %v1448 = vpop.permute.xlu0 %1447
      %vm1451 = vcmask 228352
      %v1452 = vsel %vm1451, %v1446, 0.0
      %v1453 = vsel %vm1451, %v1448, 0.0
      %v1454 = vld [vmem:[%s16 + $0x7] sm:$0x1]
      %v1455 = vlaneseq
      %v1456 = vshrl.u32 %v1455, 7
      %v1457 = vsub.s32 0, %v1456
      %v1458 = vrot.slane %v1454, %v1457
      %v1459 = vmul.f32 %v1452, %v1458
      %v1460 = vmul.f32 %v1453, %v1458
      %1461 = vset.pattern.permute.xlu0 7
      %1462 = vperm.xlu0 %1461, %v1272
      %v1463 = vpop.permute.xlu0 %1462
      %1465 = vset.pattern.permute.xlu0 7
      %1466 = vperm.xlu0 %1465, %v1273
      %v1467 = vpop.permute.xlu0 %1466
      %v1469 = vmul.f32 %v1459, %v1463
      %v1470 = vmul.f32 %v1460, %v1467
      %v1471 = vadd.f32 %v1443, %v1469
      %v1472 = vadd.f32 %v1444, %v1470
      %1473 = vrot.lane.b32.xlu0 %v1248, 123
      %v1474 = vpop.permute.xlu0 %1473
      %1475 = vrot.lane.b32.xlu0 %v1251, 123
      %v1476 = vpop.permute.xlu0 %1475
      %v1479 = vsel %vm129, %v1474, 0.0
      %v1480 = vsel %vm129, %v1476, 0.0
      %v1481 = vld [vmem:[%s16 + $0x8] sm:$0x1]
      %v1482 = vlaneseq
      %v1483 = vshrl.u32 %v1482, 7
      %v1484 = vsub.s32 0, %v1483
      %v1485 = vrot.slane %v1481, %v1484
      %v1486 = vmul.f32 %v1479, %v1485
      %v1487 = vmul.f32 %v1480, %v1485
      %1488 = vset.pattern.permute.xlu0 8
      %1489 = vperm.xlu0 %1488, %v1272
      %v1490 = vpop.permute.xlu0 %1489
      %1492 = vset.pattern.permute.xlu0 8
      %1493 = vperm.xlu0 %1492, %v1273
      %v1494 = vpop.permute.xlu0 %1493
      %v1496 = vmul.f32 %v1486, %v1490
      %v1497 = vmul.f32 %v1487, %v1494
      %v1498 = vadd.f32 %v1471, %v1496
      %v1499 = vadd.f32 %v1472, %v1497
      %v1500 = vld [vmem:[%s17] sm:$0xff]
      %v1501 = vld [vmem:[%s17 + $0x8] sm:$0xff]
      %1503 = vset.pattern.permute.xlu0 0
      %1504 = vperm.xlu0 %1503, %v1500
      %v1505 = vpop.permute.xlu0 %1504
      %1508 = vset.pattern.permute.xlu0 0
      %1509 = vperm.xlu0 %1508, %v1501
      %v1510 = vpop.permute.xlu0 %1509
      %v1512 = vadd.f32 %v1498, %v1505
      %v1513 = vadd.f32 %v1499, %v1510
      %v1514 = vmax.f32 %v1512, 0.0
      %v1515 = vmax.f32 %v1513, 0.0
      %v1516 = vld [vmem:[%s18] sm:$0xf]
      %v1517 = vld [vmem:[%s18 + $0x4] sm:$0xf]
      %v1518 = vld [vmem:[%s18 + $0x8] sm:$0xf]
      %v1519 = vld [vmem:[%s18 + $0xc] sm:$0xf]
      %v1520 = vpack.c.bf16 %v1515, %v1514
      %v1521 = vld [vmem:[%s19] sm:$0xff]
      %v1522 = vld [vmem:[%s19 + $0x8] sm:$0xff]
      %v1523 = vld [vmem:[%s19 + $0x10] sm:$0xff]
      %v1524 = vld [vmem:[%s19 + $0x18] sm:$0xff]
      %1526 = vset.pattern.permute.xlu0 0
      %1527 = vperm.xlu0 %1526, %v1521
      %v1528 = vpop.permute.xlu0 %1527
      %1531 = vset.pattern.permute.xlu0 0
      %1532 = vperm.xlu0 %1531, %v1522
      %v1533 = vpop.permute.xlu0 %1532
      %1536 = vset.pattern.permute.xlu0 0
      %1537 = vperm.xlu0 %1536, %v1523
      %v1538 = vpop.permute.xlu0 %1537
      %1541 = vset.pattern.permute.xlu0 0
      %1542 = vperm.xlu0 %1541, %v1524
      %v1543 = vpop.permute.xlu0 %1542
      %v1549 = vunpack.c.l.b16 %v1516
      %v1550 = vunpack.c.l.b16 %v1517
      %v1551 = vunpack.c.l.b16 %v1518
      %v1552 = vunpack.c.l.b16 %v1519
      %v1553 = vpack.c.b16 %v1550, %v1549
      %v1554 = vpack.c.b16 %v1552, %v1551
      %v1556 = vsel %vm995, %v1553, 0
      %v1559 = vsel %vm995, %v1554, 0
      %1561 = vmatprep.subr.bf16.mxu0 0
      %1562 = vmatpush1.bf16.msra.mxu0 0
      %1563 = vmatprep.subr.bf16.mxu0 0
      %1564 = vmatpush1.bf16.msra.mxu0 0
      %1565 = vmatprep.subr.bf16.mxu0 0
      %1566 = vmatpush1.bf16.msra.mxu0 0
      %1567 = vmatprep.subr.bf16.mxu0 0
      %1568 = vmatpush1.bf16.msra.mxu0 0
      %1569 = vmatprep.subr.bf16.mxu0 0
      %1570 = vmatpush1.bf16.msra.mxu0 0
      %1571 = vmatprep.subr.bf16.mxu0 0
      %1572 = vmatpush1.bf16.msra.mxu0 0
      %1573 = vmatprep.subr.bf16.mxu0 0
      %1574 = vmatpush1.bf16.msra.mxu0 0
      %1575 = vmatprep.subr.bf16.mxu0 0
      %1576 = vmatpush1.bf16.msra.mxu0 %v1520
      %1577 = vmatprep.subr.bf16.mxu0 0
      %1578 = vmatpush2.bf16.msra.mxu0 0
      %1579 = vmatprep.subr.bf16.mxu0 0
      %1580 = vmatpush2.bf16.msra.mxu0 0
      %1581 = vmatprep.subr.bf16.mxu0 0
      %1582 = vmatpush2.bf16.msra.mxu0 0
      %1583 = vmatprep.subr.bf16.mxu0 0
      %1584 = vmatpush2.bf16.msra.mxu0 0
      %1585 = vmatprep.subr.bf16.mxu0 0
      %1586 = vmatpush2.bf16.msra.mxu0 0
      %1587 = vmatprep.subr.bf16.mxu0 0
      %1588 = vmatpush2.bf16.msra.mxu0 0
      %1589 = vmatprep.subr.bf16.mxu0 0
      %1590 = vmatpush2.bf16.msra.mxu0 0
      %1591 = vmatprep.subr.bf16.mxu0 0
      %1592 = vmatpush2.bf16.msra.mxu0 0
      %1593 = vmatprep.mubr.bf16.mxu0 0
      %1594 = vmatmul.mubr.bf16.gmra.mxu0 %v1556
      %v1595 = vpop.f32.mrf.mxu0
      %v1596 = vadd.f32 %v1528, %v1595
      %v1597 = vpop.f32.mrf.mxu0
      %v1598 = vpop.f32.mrf.mxu0
      %v1599 = vadd.f32 %v1533, %v1598
      %v1600 = vpop.f32.mrf.mxu0
      %1601 = vmatprep.mubr.bf16.mxu0 0
      %1602 = vmatmul.mubr.bf16.gmra.mxu0 %v1559
      %v1603 = vpop.f32.mrf.mxu0
      %v1604 = vadd.f32 %v1538, %v1603
      %v1605 = vpop.f32.mrf.mxu0
      %v1606 = vpop.f32.mrf.mxu0
      %v1607 = vadd.f32 %v1543, %v1606
      %v1608 = vpop.f32.mrf.mxu0
      %1609 = vdwg.mxu0
      %v1610 = vmax.f32 %v1596, 0.0
      %v1611 = vmax.f32 %v1599, 0.0
      %v1612 = vmax.f32 %v1604, 0.0
      %v1613 = vmax.f32 %v1607, 0.0
      %1618 = vrot.lane.b32.xlu0 %v1610, 127
      %v1619 = vpop.permute.xlu0 %1618
      %1620 = vrot.lane.b32.xlu0 %v1611, 127
      %v1621 = vpop.permute.xlu0 %1620
      %1622 = vrot.lane.b32.xlu0 %v1612, 127
      %v1623 = vpop.permute.xlu0 %1622
      %1624 = vrot.lane.b32.xlu0 %v1613, 127
      %v1625 = vpop.permute.xlu0 %1624
      %v1630 = vsel %vm1395, %v1619, 0.0
      %v1631 = vsel %vm1395, %v1621, 0.0
      %v1632 = vsel %vm1395, %v1623, 0.0
      %v1633 = vsel %vm1395, %v1625, 0.0
      %v1634 = vmax.f32 %v1610, %v1630
      %v1635 = vmax.f32 %v1611, %v1631
      %v1636 = vmax.f32 %v1612, %v1632
      %v1637 = vmax.f32 %v1613, %v1633
      %1638 = vrot.lane.b32.xlu0 %v1610, 124
      %v1639 = vpop.permute.xlu0 %1638
      %1640 = vrot.lane.b32.xlu0 %v1611, 124
      %v1641 = vpop.permute.xlu0 %1640
      %1642 = vrot.lane.b32.xlu0 %v1612, 124
      %v1643 = vpop.permute.xlu0 %1642
      %1644 = vrot.lane.b32.xlu0 %v1613, 124
      %v1645 = vpop.permute.xlu0 %1644
      %v1650 = vsel %vm1451, %v1639, 0.0
      %v1651 = vsel %vm1451, %v1641, 0.0
      %v1652 = vsel %vm1451, %v1643, 0.0
      %v1653 = vsel %vm1451, %v1645, 0.0
      %1654 = vrot.lane.b32.xlu0 %v1610, 123
      %v1655 = vpop.permute.xlu0 %1654
      %1656 = vrot.lane.b32.xlu0 %v1611, 123
      %v1657 = vpop.permute.xlu0 %1656
      %1658 = vrot.lane.b32.xlu0 %v1612, 123
      %v1659 = vpop.permute.xlu0 %1658
      %1660 = vrot.lane.b32.xlu0 %v1613, 123
      %v1661 = vpop.permute.xlu0 %1660
      %v1666 = vsel %vm129, %v1655, 0.0
      %v1667 = vsel %vm129, %v1657, 0.0
      %v1668 = vsel %vm129, %v1659, 0.0
      %v1669 = vsel %vm129, %v1661, 0.0
      %v1670 = vmax.f32 %v1650, %v1666
      %v1671 = vmax.f32 %v1651, %v1667
      %v1672 = vmax.f32 %v1652, %v1668
      %v1673 = vmax.f32 %v1653, %v1669
      %v1674 = vmax.f32 %v1634, %v1670
      %v1675 = vmax.f32 %v1635, %v1671
      %v1676 = vmax.f32 %v1636, %v1672
      %v1677 = vmax.f32 %v1637, %v1673
      %v1678 = vpack.c.bf16 %v1675, %v1674
      %v1679 = vpack.c.bf16 %v1677, %v1676
      %v1680 = vld [vmem:[%s20] sm:$0xf]
      %v1681 = vld [vmem:[%s20 + $0x4] sm:$0xf]
      %v1682 = vld [vmem:[%s20 + $0x8] sm:$0xf]
      %v1683 = vld [vmem:[%s20 + $0xc] sm:$0xf]
      %v1688 = vunpack.c.l.b16 %v1680
      %v1689 = vunpack.c.l.b16 %v1681
      %v1690 = vunpack.c.l.b16 %v1682
      %v1691 = vunpack.c.l.b16 %v1683
      %v1692 = vpack.c.b16 %v1689, %v1688
      %v1693 = vpack.c.b16 %v1691, %v1690
      %v1697 = vsel %vm1064, %v1678, 0
      %v1700 = vsel %vm1064, %v1679, 0
      %1702 = vmatprep.subr.bf16.mxu0 0
      %1703 = vmatpush1.bf16.msra.mxu0 0
      %1704 = vmatprep.subr.bf16.mxu0 0
      %1705 = vmatpush1.bf16.msra.mxu0 0
      %1706 = vmatprep.subr.bf16.mxu0 0
      %1707 = vmatpush1.bf16.msra.mxu0 0
      %1708 = vmatprep.subr.bf16.mxu0 0
      %1709 = vmatpush1.bf16.msra.mxu0 0
      %1710 = vmatprep.subr.bf16.mxu0 0
      %1711 = vmatpush1.bf16.msra.mxu0 0
      %1712 = vmatprep.subr.bf16.mxu0 0
      %1713 = vmatpush1.bf16.msra.mxu0 0
      %1714 = vmatprep.subr.bf16.mxu0 0
      %1715 = vmatpush1.bf16.msra.mxu0 %v1693
      %1716 = vmatprep.subr.bf16.mxu0 0
      %1717 = vmatpush1.bf16.msra.mxu0 %v1692
      %1718 = vmatprep.subr.bf16.mxu0 0
      %1719 = vmatpush2.bf16.msra.mxu0 0
      %1720 = vmatprep.subr.bf16.mxu0 0
      %1721 = vmatpush2.bf16.msra.mxu0 0
      %1722 = vmatprep.subr.bf16.mxu0 0
      %1723 = vmatpush2.bf16.msra.mxu0 0
      %1724 = vmatprep.subr.bf16.mxu0 0
      %1725 = vmatpush2.bf16.msra.mxu0 0
      %1726 = vmatprep.subr.bf16.mxu0 0
      %1727 = vmatpush2.bf16.msra.mxu0 0
      %1728 = vmatprep.subr.bf16.mxu0 0
      %1729 = vmatpush2.bf16.msra.mxu0 0
      %1730 = vmatprep.subr.bf16.mxu0 0
      %1731 = vmatpush2.bf16.msra.mxu0 0
      %1732 = vmatprep.subr.bf16.mxu0 0
      %1733 = vmatpush2.bf16.msra.mxu0 0
      %1734 = vmatprep.mubr.bf16.mxu0 0
      %1735 = vmatmul.mubr.bf16.gmra.mxu0 %v1697
      %v1736 = vpop.f32.mrf.mxu0
      %v1737 = vadd.f32 0.0, %v1736
      %v1738 = vpop.f32.mrf.mxu0
      %v1739 = vpop.f32.mrf.mxu0
      %v1740 = vadd.f32 0.0, %v1739
      %v1741 = vpop.f32.mrf.mxu0
      %1742 = vmatprep.mubr.bf16.mxu0 0
      %1743 = vmatmul.mubr.bf16.gmra.mxu0 %v1700
      %v1744 = vpop.f32.mrf.mxu0
      %v1745 = vadd.f32 0.0, %v1744
      %v1746 = vpop.f32.mrf.mxu0
      %v1747 = vpop.f32.mrf.mxu0
      %v1748 = vadd.f32 0.0, %v1747
      %v1749 = vpop.f32.mrf.mxu0
      %1750 = vdwg.mxu0
      %v1751 = vld [vmem:[%s21] sm:$0x7]
      %v1752 = vpack.c.bf16 %v1740, %v1737
      %v1753 = vpack.c.bf16 %v1748, %v1745
      %v1754 = vld [vmem:[%s22] sm:$0x3f]
      %1756 = vset.pattern.permute.xlu0 0
      %1757 = vperm.xlu0 %1756, %v1754
      %v1758 = vpop.permute.xlu0 %1757
      %v1761 = vsel %vm1064, %v1751, 0
      %1763 = vmatprep.subr.bf16.mxu0 0
      %1764 = vmatpush1.bf16.msra.mxu0 0
      %1765 = vmatprep.subr.bf16.mxu0 0
      %1766 = vmatpush1.bf16.msra.mxu0 0
      %1767 = vmatprep.subr.bf16.mxu0 0
      %1768 = vmatpush1.bf16.msra.mxu0 0
      %1769 = vmatprep.subr.bf16.mxu0 0
      %1770 = vmatpush1.bf16.msra.mxu0 0
      %1771 = vmatprep.subr.bf16.mxu0 0
      %1772 = vmatpush1.bf16.msra.mxu0 0
      %1773 = vmatprep.subr.bf16.mxu0 0
      %1774 = vmatpush1.bf16.msra.mxu0 0
      %1775 = vmatprep.subr.bf16.mxu0 0
      %1776 = vmatpush1.bf16.msra.mxu0 %v1753
      %1777 = vmatprep.subr.bf16.mxu0 0
      %1778 = vmatpush1.bf16.msra.mxu0 %v1752
      %1779 = vmatprep.subr.bf16.mxu0 0
      %1780 = vmatpush2.bf16.msra.mxu0 0
      %1781 = vmatprep.subr.bf16.mxu0 0
      %1782 = vmatpush2.bf16.msra.mxu0 0
      %1783 = vmatprep.subr.bf16.mxu0 0
      %1784 = vmatpush2.bf16.msra.mxu0 0
      %1785 = vmatprep.subr.bf16.mxu0 0
      %1786 = vmatpush2.bf16.msra.mxu0 0
      %1787 = vmatprep.subr.bf16.mxu0 0
      %1788 = vmatpush2.bf16.msra.mxu0 0
      %1789 = vmatprep.subr.bf16.mxu0 0
      %1790 = vmatpush2.bf16.msra.mxu0 0
      %1791 = vmatprep.subr.bf16.mxu0 0
      %1792 = vmatpush2.bf16.msra.mxu0 0
      %1793 = vmatprep.subr.bf16.mxu0 0
      %1794 = vmatpush2.bf16.msra.mxu0 0
      %1795 = vmatprep.mubr.bf16.mxu0 0
      %1796 = vmatmul.mubr.bf16.gmra.mxu0 %v1761
      %v1797 = vpop.f32.mrf.mxu0
      %v1798 = vadd.f32 %v1758, %v1797
      %v1799 = vpop.f32.mrf.mxu0
      %v1800 = vpop.f32.mrf.mxu0
      %v1801 = vpop.f32.mrf.mxu0
      %1802 = vdwg.mxu0
      %1803 = vst.msk [vmem:[%s23] sm:$0x3f] %vm1108, %v1798
    $region101: #{_forward_impl.1} parent=1 // pred_fallthru
      _
    // Predicated region
    $region102: #{_forward_impl.1} parent=1 // pred_check
      _
    $region103: #{_forward_impl.1} parent=1 // pred_check_branch
      %1805 = sbr.rel (0) target = $region105
    $region104: #{_forward_impl.1} parent=1 // pred_region
      _
    $region105: #{_forward_impl.1} parent=1 // pred_fallthru
      _
    // Predicated region
    $region106: #{_forward_impl.1} parent=1 // pred_check
      _
    $region107: #{_forward_impl.1} parent=1 // pred_check_branch
      %1807 = sbr.rel (0) target = $region109
    $region108: #{_forward_impl.1} parent=1 // pred_region
      %s1809 = ssub.s32 16, 16
      %1810 = vsyncadd [#allocation4], %s1809
      %1813 = dma.smem_to_hbm [#allocation3], 16, %s24, [#allocation4]
    $region109: #{_forward_impl.1} parent=1 // pred_fallthru
      _
    // Predicated region
    $region110: #{_forward_impl.1} parent=1 // pred_check
      _
    $region111: #{_forward_impl.1} parent=1 // pred_check_branch
      %1815 = sbr.rel (0) target = $region113
    $region112: #{_forward_impl.1} parent=1 // pred_region
      _
    $region113: #{_forward_impl.1} parent=1 // pred_fallthru
      _
    // Predicated region
    $region114: #{_forward_impl.1} parent=1 // pred_check
      _
    $region115: #{_forward_impl.1} parent=1 // pred_check_branch
      %1817 = sbr.rel (0) target = $region117
    $region116: #{_forward_impl.1} parent=1 // pred_region
      %1818 = dma.done [#allocation4], 16
    $region117: #{_forward_impl.1} parent=1 // pred_fallthru
      _
    %1819 = sfence
    %1820 = vsyncpa [#allocation4], 1

</llo_original>
